<compile_context>
chip_gen: v7x
topology: tpu7x:2x2x1
jax: 0.10.0
libtpu: 0.0.40
codegen_flags: <defaults>
</compile_context>

<pallas_src>
import math
from functools import partial

import jax
import jax.numpy as jnp
from jax import lax
from jax.experimental import pallas as pl
from jax.experimental.pallas import tpu as pltpu


# ---------------------------------------------------------------------------
# Helpers
# ---------------------------------------------------------------------------
_DN_RHS_LAST = (((1,), (1,)), ((), ()))      # contract last dim of both operands
_VMEM_LIMIT = 48 * 1024 * 1024               # > v5e/v6e default scoped, < v7x physical


def _row_tile(n, target=512):
    """Return (tile, padded_n) with padded_n % tile == 0 and tile bounded by target."""
    if n <= target:
        return n, n                                  # single step, block == full dim
    for t in range(target, 7, -8):                   # largest mult-of-8 divisor
        if n % t == 0:
            return t, n
    padded = ((n + target - 1) // target) * target   # pad rows, slice back after
    return target, padded


def _seq_tile(length, target=256):
    """Query-tile for the attention grid (bounds VMEM; multiple of 8 or == length)."""
    if length <= target:
        return length
    for t in range(target, 7, -8):
        if length % t == 0:
            return t
    # TODO(synk): masked tail for awkward L instead of one full-length block.
    return length


def _pad_rows(x, padded_n):
    n = x.shape[0]
    if padded_n == n:
        return x
    return jnp.pad(x, ((0, padded_n - n), (0, 0)))


def _expand_stream_weight(w, n_heads, stream):
    """(H*E, dm) -> (2*H*E, dm): this stream's rows at head-interleaved positions,
    zero rows at the other stream's positions. One-time, weight-sized wrapper op."""
    he, dm = w.shape
    e = he // n_heads
    z = jnp.zeros((n_heads, 2, e, dm), w.dtype)
    z = z.at[:, stream].set(w.reshape(n_heads, e, dm))
    return z.reshape(2 * he, dm)


def _interleave_bias(b1, b2, n_heads):
    he = b1.shape[0]
    e = he // n_heads
    return jnp.stack([b1.reshape(n_heads, e), b2.reshape(n_heads, e)],
                     axis=1).reshape(2 * he)


# ---------------------------------------------------------------------------
# Pallas kernels
# ---------------------------------------------------------------------------
def _linear_kernel(x_ref, w_ref, b_ref, o_ref):
    """y = x @ W^T + b, W in PyTorch (Dout, Din) layout (pre-cast to bf16), fp32 acc."""
    y = lax.dot_general(x_ref[...].astype(jnp.bfloat16), w_ref[...], _DN_RHS_LAST,
                        preferred_element_type=jnp.float32)
    o_ref[...] = (y + b_ref[...]).astype(o_ref.dtype)


def _dual_proj_kernel(x1_ref, x2_ref, w1_ref, w2_ref, b_ref, o_ref):
    """Fused dual projection writing the head-interleaved layout [X1_h ‖ X2_h] per head.
    w1/w2 are wrapper-expanded to (2*H*E, dm) with zero rows at the other stream's
    interleaved positions -> two full-width dots + add + one lane-dense store."""
    y = lax.dot_general(x1_ref[...].astype(jnp.bfloat16), w1_ref[...], _DN_RHS_LAST,
                        preferred_element_type=jnp.float32)
    y = y + lax.dot_general(x2_ref[...].astype(jnp.bfloat16), w2_ref[...], _DN_RHS_LAST,
                            preferred_element_type=jnp.float32)
    o_ref[...] = (y + b_ref[...]).astype(o_ref.dtype)


def _dual_attention_kernel(qcat_ref, kcat_ref, v_ref, o_ref, *rest,
                           n_heads, scale, output_attention):
    """One (batch, L-tile) block, all H heads. qcat/kcat carry [X_h ‖ X2_h] per head so
    the dual-stream score is a single MXU dot with contraction 2E per head."""
    a_ref = rest[0] if output_attention else None
    H = n_heads
    e2 = qcat_ref.shape[-1] // H             # 2E
    d = v_ref.shape[-1] // H                 # D
    direct_store = (d % 128 == 0)            # lane-aligned per-head store

    ctx_parts = []
    for h in range(H):                        # H is small & static -> unrolled
        # Fold 1/sqrt(E) into q (tL*2E mul) instead of scaling the (tL,S) scores.
        q = (qcat_ref[0, :, h * e2:(h + 1) * e2] * scale).astype(jnp.bfloat16)
        k = kcat_ref[0, :, h * e2:(h + 1) * e2].astype(jnp.bfloat16)
        vh = v_ref[0, :, h * d:(h + 1) * d].astype(jnp.bfloat16)

        s = lax.dot_general(q, k, _DN_RHS_LAST,
                            preferred_element_type=jnp.float32)          # (tL, S)
        m = jnp.max(s, axis=-1, keepdims=True)
        p = jnp.exp(s - m)                                               # fp32 (v5e-safe)
        denom = jnp.sum(p, axis=-1, keepdims=True)

        if output_attention:
            attn = p / denom                                             # exact for parity
            a_ref[0, h] = attn.astype(a_ref.dtype)
            ctx = jnp.dot(attn.astype(jnp.bfloat16), vh,
                          preferred_element_type=jnp.float32)
        else:
            # Normalize AFTER the PV matmul: tL*D multiply instead of tL*S.
            ctx = jnp.dot(p.astype(jnp.bfloat16), vh,
                          preferred_element_type=jnp.float32)
            ctx = ctx * pl.reciprocal(denom, approx=True)

        if direct_store:
            o_ref[0, :, h * d:(h + 1) * d] = ctx.astype(o_ref.dtype)
        else:
            ctx_parts.append(ctx)

    if not direct_store:
        # D < 128: keep a single lane concat + one full-width store.
        o_ref[0] = jnp.concatenate(ctx_parts, axis=-1).astype(o_ref.dtype)


# ---------------------------------------------------------------------------
# pallas_call wrappers
# ---------------------------------------------------------------------------
def pallas_linear(x, w, b):
    """PyTorch nn.Linear semantics: x:(N,Din), w:(Dout,Din), b:(Dout,)."""
    n, din = x.shape
    dout = w.shape[0]
    tm, n_pad = _row_tile(n)
    xp = _pad_rows(x, n_pad)
    out = pl.pallas_call(
        _linear_kernel,
        grid=(n_pad // tm,),
        in_specs=[
            pl.BlockSpec((tm, din), lambda i: (i, 0)),
            pl.BlockSpec((dout, din), lambda i: (0, 0)),
            pl.BlockSpec((1, dout), lambda i: (0, 0)),
        ],
        out_specs=pl.BlockSpec((tm, dout), lambda i: (i, 0)),
        out_shape=jax.ShapeDtypeStruct((n_pad, dout), jnp.float32),
        compiler_params=pltpu.CompilerParams(
            dimension_semantics=("parallel",), vmem_limit_bytes=_VMEM_LIMIT),
    )(xp, w.astype(jnp.bfloat16), b.reshape(1, dout))
    return out[:n] if n_pad != n else out


def pallas_dual_projection(x1, x2, w1, w2, b1, b2, n_heads):
    """Two fused projections -> (N, H*2E) head-interleaved layout [X1_h ‖ X2_h]."""
    n, dm = x1.shape
    he = w1.shape[0]
    tm, n_pad = _row_tile(n)
    x1p = _pad_rows(x1, n_pad)
    x2p = _pad_rows(x2, n_pad)
    w1e = _expand_stream_weight(w1, n_heads, 0).astype(jnp.bfloat16)
    w2e = _expand_stream_weight(w2, n_heads, 1).astype(jnp.bfloat16)
    bcat = _interleave_bias(b1, b2, n_heads).reshape(1, 2 * he)
    out = pl.pallas_call(
        _dual_proj_kernel,
        grid=(n_pad // tm,),
        in_specs=[
            pl.BlockSpec((tm, dm), lambda i: (i, 0)),
            pl.BlockSpec((tm, dm), lambda i: (i, 0)),
            pl.BlockSpec((2 * he, dm), lambda i: (0, 0)),
            pl.BlockSpec((2 * he, dm), lambda i: (0, 0)),
            pl.BlockSpec((1, 2 * he), lambda i: (0, 0)),
        ],
        out_specs=pl.BlockSpec((tm, 2 * he), lambda i: (i, 0)),
        out_shape=jax.ShapeDtypeStruct((n_pad, 2 * he), jnp.float32),
        compiler_params=pltpu.CompilerParams(
            dimension_semantics=("parallel",), vmem_limit_bytes=_VMEM_LIMIT),
    )(x1p, x2p, w1e, w2e, bcat)
    return out[:n] if n_pad != n else out


def pallas_dual_attention(qcat, kcat, v, *, n_heads, scale,
                          output_attention=False, attn_dtype=jnp.bfloat16):
    """qcat:(B,L,H*2E), kcat:(B,S,H*2E), v:(B,S,H*D) -> out (B,L,H*D)[, attn (B,H,L,S)]."""
    B, L, he2 = qcat.shape
    S = kcat.shape[1]
    hd = v.shape[2]
    H = n_heads
    tL = _seq_tile(L)
    nL = L // tL

    o_spec = pl.BlockSpec((1, tL, hd), lambda b, l: (b, l, 0))
    o_shape = jax.ShapeDtypeStruct((B, L, hd), jnp.float32)
    if output_attention:
        out_specs = (o_spec, pl.BlockSpec((1, H, tL, S), lambda b, l: (b, 0, l, 0)))
        out_shape = (o_shape, jax.ShapeDtypeStruct((B, H, L, S), attn_dtype))
    else:
        out_specs = o_spec
        out_shape = o_shape

    res = pl.pallas_call(
        partial(_dual_attention_kernel, n_heads=H, scale=scale,
                output_attention=output_attention),
        grid=(B, nL),
        in_specs=[
            pl.BlockSpec((1, tL, he2), lambda b, l: (b, l, 0)),
            pl.BlockSpec((1, S, he2), lambda b, l: (b, 0, 0)),   # revisited across l
            pl.BlockSpec((1, S, hd), lambda b, l: (b, 0, 0)),    # revisited across l
        ],
        out_specs=out_specs,
        out_shape=out_shape,
        compiler_params=pltpu.CompilerParams(
            dimension_semantics=("parallel", "parallel"),
            vmem_limit_bytes=_VMEM_LIMIT),
    )(qcat, kcat, v)

    if output_attention:
        return res[0], res[1]
    return res, None


# ---------------------------------------------------------------------------
# AttentionLayer2 forward
# ---------------------------------------------------------------------------
def attention_layer2_forward(params, queries, keys, queries2, keys2, values,
                             attn_mask=None, *, n_heads, mix=False,
                             output_attention=False, attn_dtype=jnp.bfloat16):
    B, L, dm = queries.shape
    _, S, _ = keys.shape
    H = n_heads

    wq, bq = params["query"]
    wk, bk = params["key"]
    wq2, bq2 = params["query2"]
    wk2, bk2 = params["key2"]
    wv, bv = params["value"]
    wo, bo = params["out"]

    HE = wq.shape[0]
    E = HE // H
    HD = wv.shape[0]
    D = HD // H
    scale = 1.0 / math.sqrt(E)

    # Fused dual projections, head-interleaved layout — no (B,H,L,E) transposes.
    qcat = pallas_dual_projection(queries.reshape(B * L, dm),
                                  queries2.reshape(B * L, dm),
                                  wq, wq2, bq, bq2, H).reshape(B, L, 2 * HE)
    kcat = pallas_dual_projection(keys.reshape(B * S, dm),
                                  keys2.reshape(B * S, dm),
                                  wk, wk2, bk, bk2, H).reshape(B, S, 2 * HE)
    v = pallas_linear(values.reshape(B * S, dm), wv, bv).reshape(B, S, HD)

    # TODO(synk): attn_mask is accepted but ignored (mask_flag=False behavior).
    out, attn = pallas_dual_attention(qcat, kcat, v, n_heads=H, scale=scale,
                                      output_attention=output_attention,
                                      attn_dtype=attn_dtype)
    # out is (B, L, H*D) == (B, L, H, D) flattened (the non-mix PyTorch layout).
    if mix:
        # TODO(synk): if mix=True is hot, emit this layout directly from the kernel.
        out = jnp.transpose(out.reshape(B, L, H, D), (0, 2, 1, 3)).reshape(B, L, H * D)

    out = pallas_linear(out.reshape(B * L, H * D), wo, bo).reshape(B, L, -1)
    return out, attn


# ---------------------------------------------------------------------------
# Pure-JAX fp32 reference (for tolerance check against the bf16-MXU kernels)
# ---------------------------------------------------------------------------
def reference_forward(params, q, k, q2, k2, v, n_heads):
    wq, bq = params["query"]
    wk, bk = params["key"]
    wq2, bq2 = params["query2"]
    wk2, bk2 = params["key2"]
    wv, bv = params["value"]
    wo, bo = params["out"]
    B, L, _ = q.shape
    S = k.shape[1]
    H = n_heads
    E = wq.shape[0] // H
    D = wv.shape[0] // H

    def lin(x, w, b):
        return x @ w.T + b

    Q = lin(q, wq, bq).reshape(B, L, H, E)
    K = lin(k, wk, bk).reshape(B, S, H, E)
    Q2 = lin(q2, wq2, bq2).reshape(B, L, H, E)
    K2 = lin(k2, wk2, bk2).reshape(B, S, H, E)
    V = lin(v, wv, bv).reshape(B, S, H, D)
    s = (jnp.einsum("blhe,bshe->bhls", Q, K) +
         jnp.einsum("blhe,bshe->bhls", Q2, K2)) / math.sqrt(E)
    A = jax.nn.softmax(s, axis=-1)
    out = jnp.einsum("bhls,bshd->blhd", A, V).reshape(B, L, H * D)
    return lin(out, wo, bo), A


# ---------------------------------------------------------------------------
# Deterministic parameter init (matches nn.Linear shapes/default init style)
# ---------------------------------------------------------------------------
def init_params(key, d_model, n_heads):
    d_keys = d_model // n_heads
    d_values = d_model // n_heads

    def init_linear(k, dout, din):
        kw, kb = jax.random.split(k)
        bound = 1.0 / math.sqrt(din)
        w = jax.random.uniform(kw, (dout, din), jnp.float32, -bound, bound)
        b = jax.random.uniform(kb, (dout,), jnp.float32, -bound, bound)
        return (w, b)

    ks = jax.random.split(key, 6)
    return {
        "query": init_linear(ks[0], d_keys * n_heads, d_model),
        "key": init_linear(ks[1], d_keys * n_heads, d_model),
        "query2": init_linear(ks[2], d_keys * n_heads, d_model),
        "key2": init_linear(ks[3], d_keys * n_heads, d_model),
        "value": init_linear(ks[4], d_values * n_heads, d_model),
        "out": init_linear(ks[5], d_model, d_values * n_heads),
    }


if __name__ == "__main__":
    B, L, S, d_model, n_heads = 2, 8, 8, 32, 4

    root = jax.random.PRNGKey(0)
    kp, kq, kk, kq2, kk2, kv = jax.random.split(root, 6)

    params = init_params(kp, d_model, n_heads)
    queries = jax.random.normal(kq, (B, L, d_model), jnp.float32)
    keys = jax.random.normal(kk, (B, S, d_model), jnp.float32)
    queries2 = jax.random.normal(kq2, (B, L, d_model), jnp.float32)
    keys2 = jax.random.normal(kk2, (B, S, d_model), jnp.float32)
    values = jax.random.normal(kv, (B, S, d_model), jnp.float32)

    # Default fast path: no attention-matrix output.
    fwd = jax.jit(partial(attention_layer2_forward, n_heads=n_heads))
    out, attn = fwd(params, queries, keys, queries2, keys2, values, None)
    jax.block_until_ready(out)
    assert out.shape == (B, L, d_model)
    assert attn is None

    # Optional path returning the (bf16, L-tiled) attention matrix.
    fwd_attn = jax.jit(partial(attention_layer2_forward, n_heads=n_heads,
                               output_attention=True))
    out2, attn2 = fwd_attn(params, queries, keys, queries2, keys2, values, None)
    jax.block_until_ready((out2, attn2))
    assert out2.shape == (B, L, d_model)
    assert attn2.shape == (B, n_heads, L, S)

    # Tolerance check vs fp32 reference (bf16 MXU operands => ~1e-2 level deviation).
    ref_out, ref_attn = reference_forward(params, queries, keys, queries2, keys2,
                                          values, n_heads)
    assert bool(jnp.max(jnp.abs(out - ref_out)) < 1e-1)
    assert bool(jnp.max(jnp.abs(out2 - ref_out)) < 1e-1)
    assert bool(jnp.max(jnp.abs(attn2.astype(jnp.float32) - ref_attn)) < 5e-2)

    print("KERNEL_OK")
</pallas_src>

<mosaic_0001>
module attributes {stable_mosaic.version = 11 : i64} {
  func.func @_linear_kernel(%arg0: i32, %arg1: memref<16x32xf32, #tpu.memory_space<vmem>>, %arg2: memref<32x32xbf16, #tpu.memory_space<vmem>>, %arg3: memref<1x32xf32, #tpu.memory_space<vmem>>, %arg4: memref<16x32xf32, #tpu.memory_space<vmem>>) attributes {dimension_semantics = [#tpu.dimension_semantics<parallel>], iteration_bounds = array<i64: 1>, scalar_prefetch = 0 : i64, scratch_operands = 0 : i64, tpu.core_type = #tpu.core_type<tc>, window_params = [{transform_indices = @transform_0, window_bounds = array<i64: 16, 32>}, {pipeline_mode = #tpu.pipeline_mode<synchronous>, transform_indices = @transform_1, window_bounds = array<i64: 32, 32>}, {pipeline_mode = #tpu.pipeline_mode<synchronous>, transform_indices = @transform_2, window_bounds = array<i64: 1, 32>}, {transform_indices = @transform_3, window_bounds = array<i64: 16, 32>}]} {
    %c0 = arith.constant 0 : index
    %c0_0 = arith.constant 0 : index
    %0 = vector.load %arg1[%c0, %c0_0] : memref<16x32xf32, #tpu.memory_space<vmem>>, vector<16x32xf32>
    %1 = arith.truncf %0 : vector<16x32xf32> to vector<16x32xbf16>
    %c0_1 = arith.constant 0 : index
    %c0_2 = arith.constant 0 : index
    %2 = vector.load %arg2[%c0_1, %c0_2] : memref<32x32xbf16, #tpu.memory_space<vmem>>, vector<32x32xbf16>
    %cst = arith.constant dense<0.000000e+00> : vector<16x32xf32>
    %3 = tpu.matmul %1, %2, %cst {dimension_numbers = #tpu.dot_dimension_numbers<[1], [1], [0], [0], [0, 0, 1, 0], [], []>} : vector<16x32xbf16>, vector<32x32xbf16>, vector<16x32xf32> -> vector<16x32xf32>
    %c0_3 = arith.constant 0 : index
    %c0_4 = arith.constant 0 : index
    %4 = vector.load %arg3[%c0_3, %c0_4] : memref<1x32xf32, #tpu.memory_space<vmem>>, vector<1x32xf32>
    %5 = vector.broadcast %4 : vector<1x32xf32> to vector<16x32xf32>
    %6 = arith.addf %3, %5 : vector<16x32xf32>
    %c0_5 = arith.constant 0 : index
    %c0_6 = arith.constant 0 : index
    %7 = vector.load %arg4[%c0_5, %c0_6] : memref<16x32xf32, #tpu.memory_space<vmem>>, vector<16x32xf32>
    tpu.vector_store %arg4[%c0_5, %c0_6], %6 {strides = array<i32>} : memref<16x32xf32, #tpu.memory_space<vmem>>, vector<16x32xf32>,
    return
  }
  func.func @transform_0(%arg0: i32) -> (i32, i32) {
    %c0_i32 = arith.constant 0 : i32
    %c0_i32_0 = arith.constant 0 : i32
    return %arg0, %c0_i32 : i32, i32
  }
  func.func @transform_1(%arg0: i32) -> (i32, i32) {
    %c0_i32 = arith.constant 0 : i32
    %c0_i32_0 = arith.constant 0 : i32
    %c0_i32_1 = arith.constant 0 : i32
    return %c0_i32, %c0_i32_0 : i32, i32
  }
  func.func @transform_2(%arg0: i32) -> (i32, i32) {
    %c0_i32 = arith.constant 0 : i32
    %c0_i32_0 = arith.constant 0 : i32
    %c0_i32_1 = arith.constant 0 : i32
    return %c0_i32, %c0_i32_0 : i32, i32
  }
  func.func @transform_3(%arg0: i32) -> (i32, i32) {
    %c0_i32 = arith.constant 0 : i32
    %c0_i32_0 = arith.constant 0 : i32
    return %arg0, %c0_i32 : i32, i32
  }
}

module attributes {stable_mosaic.version = 11 : i64} {
  func.func @_dual_proj_kernel(%arg0: i32, %arg1: memref<16x32xf32, #tpu.memory_space<vmem>>, %arg2: memref<16x32xf32, #tpu.memory_space<vmem>>, %arg3: memref<64x32xbf16, #tpu.memory_space<vmem>>, %arg4: memref<64x32xbf16, #tpu.memory_space<vmem>>, %arg5: memref<1x64xf32, #tpu.memory_space<vmem>>, %arg6: memref<16x64xf32, #tpu.memory_space<vmem>>) attributes {dimension_semantics = [#tpu.dimension_semantics<parallel>], iteration_bounds = array<i64: 1>, scalar_prefetch = 0 : i64, scratch_operands = 0 : i64, tpu.core_type = #tpu.core_type<tc>, window_params = [{transform_indices = @transform_0, window_bounds = array<i64: 16, 32>}, {transform_indices = @transform_1, window_bounds = array<i64: 16, 32>}, {pipeline_mode = #tpu.pipeline_mode<synchronous>, transform_indices = @transform_2, window_bounds = array<i64: 64, 32>}, {pipeline_mode = #tpu.pipeline_mode<synchronous>, transform_indices = @transform_3, window_bounds = array<i64: 64, 32>}, {pipeline_mode = #tpu.pipeline_mode<synchronous>, transform_indices = @transform_4, window_bounds = array<i64: 1, 64>}, {transform_indices = @transform_5, window_bounds = array<i64: 16, 64>}]} {
    %c0 = arith.constant 0 : index
    %c0_0 = arith.constant 0 : index
    %0 = vector.load %arg1[%c0, %c0_0] : memref<16x32xf32, #tpu.memory_space<vmem>>, vector<16x32xf32>
    %1 = arith.truncf %0 : vector<16x32xf32> to vector<16x32xbf16>
    %c0_1 = arith.constant 0 : index
    %c0_2 = arith.constant 0 : index
    %2 = vector.load %arg3[%c0_1, %c0_2] : memref<64x32xbf16, #tpu.memory_space<vmem>>, vector<64x32xbf16>
    %cst = arith.constant dense<0.000000e+00> : vector<16x64xf32>
    %3 = tpu.matmul %1, %2, %cst {dimension_numbers = #tpu.dot_dimension_numbers<[1], [1], [0], [0], [0, 0, 1, 0], [], []>} : vector<16x32xbf16>, vector<64x32xbf16>, vector<16x64xf32> -> vector<16x64xf32>
    %c0_3 = arith.constant 0 : index
    %c0_4 = arith.constant 0 : index
    %4 = vector.load %arg2[%c0_3, %c0_4] : memref<16x32xf32, #tpu.memory_space<vmem>>, vector<16x32xf32>
    %5 = arith.truncf %4 : vector<16x32xf32> to vector<16x32xbf16>
    %c0_5 = arith.constant 0 : index
    %c0_6 = arith.constant 0 : index
    %6 = vector.load %arg4[%c0_5, %c0_6] : memref<64x32xbf16, #tpu.memory_space<vmem>>, vector<64x32xbf16>
    %cst_7 = arith.constant dense<0.000000e+00> : vector<16x64xf32>
    %7 = tpu.matmul %5, %6, %cst_7 {dimension_numbers = #tpu.dot_dimension_numbers<[1], [1], [0], [0], [0, 0, 1, 0], [], []>} : vector<16x32xbf16>, vector<64x32xbf16>, vector<16x64xf32> -> vector<16x64xf32>
    %8 = arith.addf %3, %7 : vector<16x64xf32>
    %c0_8 = arith.constant 0 : index
    %c0_9 = arith.constant 0 : index
    %9 = vector.load %arg5[%c0_8, %c0_9] : memref<1x64xf32, #tpu.memory_space<vmem>>, vector<1x64xf32>
    %10 = vector.broadcast %9 : vector<1x64xf32> to vector<16x64xf32>
    %11 = arith.addf %8, %10 : vector<16x64xf32>
    %c0_10 = arith.constant 0 : index
    %c0_11 = arith.constant 0 : index
    %12 = vector.load %arg6[%c0_10, %c0_11] : memref<16x64xf32, #tpu.memory_space<vmem>>, vector<16x64xf32>
    tpu.vector_store %arg6[%c0_10, %c0_11], %11 {strides = array<i32>} : memref<16x64xf32, #tpu.memory_space<vmem>>, vector<16x64xf32>,
    return
  }
  func.func @transform_0(%arg0: i32) -> (i32, i32) {
    %c0_i32 = arith.constant 0 : i32
    %c0_i32_0 = arith.constant 0 : i32
    return %arg0, %c0_i32 : i32, i32
  }
  func.func @transform_1(%arg0: i32) -> (i32, i32) {
    %c0_i32 = arith.constant 0 : i32
    %c0_i32_0 = arith.constant 0 : i32
    return %arg0, %c0_i32 : i32, i32
  }
  func.func @transform_2(%arg0: i32) -> (i32, i32) {
    %c0_i32 = arith.constant 0 : i32
    %c0_i32_0 = arith.constant 0 : i32
    %c0_i32_1 = arith.constant 0 : i32
    return %c0_i32, %c0_i32_0 : i32, i32
  }
  func.func @transform_3(%arg0: i32) -> (i32, i32) {
    %c0_i32 = arith.constant 0 : i32
    %c0_i32_0 = arith.constant 0 : i32
    %c0_i32_1 = arith.constant 0 : i32
    return %c0_i32, %c0_i32_0 : i32, i32
  }
  func.func @transform_4(%arg0: i32) -> (i32, i32) {
    %c0_i32 = arith.constant 0 : i32
    %c0_i32_0 = arith.constant 0 : i32
    %c0_i32_1 = arith.constant 0 : i32
    return %c0_i32, %c0_i32_0 : i32, i32
  }
  func.func @transform_5(%arg0: i32) -> (i32, i32) {
    %c0_i32 = arith.constant 0 : i32
    %c0_i32_0 = arith.constant 0 : i32
    return %arg0, %c0_i32 : i32, i32
  }
}

module attributes {stable_mosaic.version = 11 : i64} {
  func.func @_dual_attention_kernel(%arg0: i32, %arg1: i32, %arg2: memref<1x8x64xf32, #tpu.memory_space<vmem>>, %arg3: memref<1x8x64xf32, #tpu.memory_space<vmem>>, %arg4: memref<1x8x32xf32, #tpu.memory_space<vmem>>, %arg5: memref<1x8x32xf32, #tpu.memory_space<vmem>>) attributes {dimension_semantics = [#tpu.dimension_semantics<parallel>, #tpu.dimension_semantics<parallel>], iteration_bounds = array<i64: 2, 1>, scalar_prefetch = 0 : i64, scratch_operands = 0 : i64, tpu.core_type = #tpu.core_type<tc>, window_params = [{transform_indices = @transform_0, window_bounds = array<i64: 1, 8, 64>}, {transform_indices = @transform_1, window_bounds = array<i64: 1, 8, 64>}, {transform_indices = @transform_2, window_bounds = array<i64: 1, 8, 32>}, {transform_indices = @transform_3, window_bounds = array<i64: 1, 8, 32>}]} {
    %c0 = arith.constant 0 : index
    %c0_0 = arith.constant 0 : index
    %c0_1 = arith.constant 0 : index
    %0 = vector.load %arg2[%c0, %c0_0, %c0_1] : memref<1x8x64xf32, #tpu.memory_space<vmem>>, vector<1x8x16xf32>
    %1 = vector.shape_cast %0 : vector<1x8x16xf32> to vector<8x16xf32>
    %cst = arith.constant 0.353553385 : f32
    %2 = vector.broadcast %cst : f32 to vector<8x16xf32>
    %3 = arith.mulf %1, %2 : vector<8x16xf32>
    %4 = arith.truncf %3 : vector<8x16xf32> to vector<8x16xbf16>
    %c0_2 = arith.constant 0 : index
    %c0_3 = arith.constant 0 : index
    %c0_4 = arith.constant 0 : index
    %5 = vector.load %arg3[%c0_2, %c0_3, %c0_4] : memref<1x8x64xf32, #tpu.memory_space<vmem>>, vector<1x8x16xf32>
    %6 = vector.shape_cast %5 : vector<1x8x16xf32> to vector<8x16xf32>
    %7 = arith.truncf %6 : vector<8x16xf32> to vector<8x16xbf16>
    %c0_5 = arith.constant 0 : index
    %c0_6 = arith.constant 0 : index
    %c0_7 = arith.constant 0 : index
    %8 = vector.load %arg4[%c0_5, %c0_6, %c0_7] : memref<1x8x32xf32, #tpu.memory_space<vmem>>, vector<1x8x8xf32>
    %9 = vector.shape_cast %8 : vector<1x8x8xf32> to vector<8x8xf32>
    %10 = arith.truncf %9 : vector<8x8xf32> to vector<8x8xbf16>
    %cst_8 = arith.constant dense<0.000000e+00> : vector<8x8xf32>
    %11 = tpu.matmul %4, %7, %cst_8 {dimension_numbers = #tpu.dot_dimension_numbers<[1], [1], [0], [0], [0, 0, 1, 0], [], []>} : vector<8x16xbf16>, vector<8x16xbf16>, vector<8x8xf32> -> vector<8x8xf32>
    %cst_9 = arith.constant dense<0xFF800000> : vector<8xf32>
    %12 = vector.multi_reduction <maximumf>, %11, %cst_9 [1] : vector<8x8xf32> to vector<8xf32>
    %13 = vector.shape_cast %12 : vector<8xf32> to vector<8x1xf32>
    %14 = vector.broadcast %13 : vector<8x1xf32> to vector<8x8xf32>
    %15 = arith.subf %11, %14 : vector<8x8xf32>
    %16 = math.exp %15 : vector<8x8xf32>
    %cst_10 = arith.constant dense<0.000000e+00> : vector<8xf32>
    %17 = vector.multi_reduction <add>, %16, %cst_10 [1] : vector<8x8xf32> to vector<8xf32>
    %18 = vector.shape_cast %17 : vector<8xf32> to vector<8x1xf32>
    %19 = arith.truncf %16 : vector<8x8xf32> to vector<8x8xbf16>
    %cst_11 = arith.constant dense<0.000000e+00> : vector<8x8xf32>
    %20 = tpu.matmul %19, %10, %cst_11 {dimension_numbers = #tpu.dot_dimension_numbers<[1], [0], [0], [1], [0, 0, 1, 1], [], []>} : vector<8x8xbf16>, vector<8x8xbf16>, vector<8x8xf32> -> vector<8x8xf32>
    %21 = tpu.reciprocal %18 {approx = true} : vector<8x1xf32> -> vector<8x1xf32>
    %22 = vector.broadcast %21 : vector<8x1xf32> to vector<8x8xf32>
    %23 = arith.mulf %20, %22 : vector<8x8xf32>
    %c0_12 = arith.constant 0 : index
    %c0_13 = arith.constant 0 : index
    %c16 = arith.constant 16 : index
    %24 = vector.load %arg2[%c0_12, %c0_13, %c16] : memref<1x8x64xf32, #tpu.memory_space<vmem>>, vector<1x8x16xf32>
    %25 = vector.shape_cast %24 : vector<1x8x16xf32> to vector<8x16xf32>
    %cst_14 = arith.constant 0.353553385 : f32
    %26 = vector.broadcast %cst_14 : f32 to vector<8x16xf32>
    %27 = arith.mulf %25, %26 : vector<8x16xf32>
    %28 = arith.truncf %27 : vector<8x16xf32> to vector<8x16xbf16>
    %c0_15 = arith.constant 0 : index
    %c0_16 = arith.constant 0 : index
    %c16_17 = arith.constant 16 : index
    %29 = vector.load %arg3[%c0_15, %c0_16, %c16_17] : memref<1x8x64xf32, #tpu.memory_space<vmem>>, vector<1x8x16xf32>
    %30 = vector.shape_cast %29 : vector<1x8x16xf32> to vector<8x16xf32>
    %31 = arith.truncf %30 : vector<8x16xf32> to vector<8x16xbf16>
    %c0_18 = arith.constant 0 : index
    %c0_19 = arith.constant 0 : index
    %c8 = arith.constant 8 : index
    %32 = vector.load %arg4[%c0_18, %c0_19, %c8] : memref<1x8x32xf32, #tpu.memory_space<vmem>>, vector<1x8x8xf32>
    %33 = vector.shape_cast %32 : vector<1x8x8xf32> to vector<8x8xf32>
    %34 = arith.truncf %33 : vector<8x8xf32> to vector<8x8xbf16>
    %cst_20 = arith.constant dense<0.000000e+00> : vector<8x8xf32>
    %35 = tpu.matmul %28, %31, %cst_20 {dimension_numbers = #tpu.dot_dimension_numbers<[1], [1], [0], [0], [0, 0, 1, 0], [], []>} : vector<8x16xbf16>, vector<8x16xbf16>, vector<8x8xf32> -> vector<8x8xf32>
    %cst_21 = arith.constant dense<0xFF800000> : vector<8xf32>
    %36 = vector.multi_reduction <maximumf>, %35, %cst_21 [1] : vector<8x8xf32> to vector<8xf32>
    %37 = vector.shape_cast %36 : vector<8xf32> to vector<8x1xf32>
    %38 = vector.broadcast %37 : vector<8x1xf32> to vector<8x8xf32>
    %39 = arith.subf %35, %38 : vector<8x8xf32>
    %40 = math.exp %39 : vector<8x8xf32>
    %cst_22 = arith.constant dense<0.000000e+00> : vector<8xf32>
    %41 = vector.multi_reduction <add>, %40, %cst_22 [1] : vector<8x8xf32> to vector<8xf32>
    %42 = vector.shape_cast %41 : vector<8xf32> to vector<8x1xf32>
    %43 = arith.truncf %40 : vector<8x8xf32> to vector<8x8xbf16>
    %cst_23 = arith.constant dense<0.000000e+00> : vector<8x8xf32>
    %44 = tpu.matmul %43, %34, %cst_23 {dimension_numbers = #tpu.dot_dimension_numbers<[1], [0], [0], [1], [0, 0, 1, 1], [], []>} : vector<8x8xbf16>, vector<8x8xbf16>, vector<8x8xf32> -> vector<8x8xf32>
    %45 = tpu.reciprocal %42 {approx = true} : vector<8x1xf32> -> vector<8x1xf32>
    %46 = vector.broadcast %45 : vector<8x1xf32> to vector<8x8xf32>
    %47 = arith.mulf %44, %46 : vector<8x8xf32>
    %c0_24 = arith.constant 0 : index
    %c0_25 = arith.constant 0 : index
    %c32 = arith.constant 32 : index
    %48 = vector.load %arg2[%c0_24, %c0_25, %c32] : memref<1x8x64xf32, #tpu.memory_space<vmem>>, vector<1x8x16xf32>
    %49 = vector.shape_cast %48 : vector<1x8x16xf32> to vector<8x16xf32>
    %cst_26 = arith.constant 0.353553385 : f32
    %50 = vector.broadcast %cst_26 : f32 to vector<8x16xf32>
    %51 = arith.mulf %49, %50 : vector<8x16xf32>
    %52 = arith.truncf %51 : vector<8x16xf32> to vector<8x16xbf16>
    %c0_27 = arith.constant 0 : index
    %c0_28 = arith.constant 0 : index
    %c32_29 = arith.constant 32 : index
    %53 = vector.load %arg3[%c0_27, %c0_28, %c32_29] : memref<1x8x64xf32, #tpu.memory_space<vmem>>, vector<1x8x16xf32>
    %54 = vector.shape_cast %53 : vector<1x8x16xf32> to vector<8x16xf32>
    %55 = arith.truncf %54 : vector<8x16xf32> to vector<8x16xbf16>
    %c0_30 = arith.constant 0 : index
    %c0_31 = arith.constant 0 : index
    %c16_32 = arith.constant 16 : index
    %56 = vector.load %arg4[%c0_30, %c0_31, %c16_32] : memref<1x8x32xf32, #tpu.memory_space<vmem>>, vector<1x8x8xf32>
    %57 = vector.shape_cast %56 : vector<1x8x8xf32> to vector<8x8xf32>
    %58 = arith.truncf %57 : vector<8x8xf32> to vector<8x8xbf16>
    %cst_33 = arith.constant dense<0.000000e+00> : vector<8x8xf32>
    %59 = tpu.matmul %52, %55, %cst_33 {dimension_numbers = #tpu.dot_dimension_numbers<[1], [1], [0], [0], [0, 0, 1, 0], [], []>} : vector<8x16xbf16>, vector<8x16xbf16>, vector<8x8xf32> -> vector<8x8xf32>
    %cst_34 = arith.constant dense<0xFF800000> : vector<8xf32>
    %60 = vector.multi_reduction <maximumf>, %59, %cst_34 [1] : vector<8x8xf32> to vector<8xf32>
    %61 = vector.shape_cast %60 : vector<8xf32> to vector<8x1xf32>
    %62 = vector.broadcast %61 : vector<8x1xf32> to vector<8x8xf32>
    %63 = arith.subf %59, %62 : vector<8x8xf32>
    %64 = math.exp %63 : vector<8x8xf32>
    %cst_35 = arith.constant dense<0.000000e+00> : vector<8xf32>
    %65 = vector.multi_reduction <add>, %64, %cst_35 [1] : vector<8x8xf32> to vector<8xf32>
    %66 = vector.shape_cast %65 : vector<8xf32> to vector<8x1xf32>
    %67 = arith.truncf %64 : vector<8x8xf32> to vector<8x8xbf16>
    %cst_36 = arith.constant dense<0.000000e+00> : vector<8x8xf32>
    %68 = tpu.matmul %67, %58, %cst_36 {dimension_numbers = #tpu.dot_dimension_numbers<[1], [0], [0], [1], [0, 0, 1, 1], [], []>} : vector<8x8xbf16>, vector<8x8xbf16>, vector<8x8xf32> -> vector<8x8xf32>
    %69 = tpu.reciprocal %66 {approx = true} : vector<8x1xf32> -> vector<8x1xf32>
    %70 = vector.broadcast %69 : vector<8x1xf32> to vector<8x8xf32>
    %71 = arith.mulf %68, %70 : vector<8x8xf32>
    %c0_37 = arith.constant 0 : index
    %c0_38 = arith.constant 0 : index
    %c48 = arith.constant 48 : index
    %72 = vector.load %arg2[%c0_37, %c0_38, %c48] : memref<1x8x64xf32, #tpu.memory_space<vmem>>, vector<1x8x16xf32>
    %73 = vector.shape_cast %72 : vector<1x8x16xf32> to vector<8x16xf32>
    %cst_39 = arith.constant 0.353553385 : f32
    %74 = vector.broadcast %cst_39 : f32 to vector<8x16xf32>
    %75 = arith.mulf %73, %74 : vector<8x16xf32>
    %76 = arith.truncf %75 : vector<8x16xf32> to vector<8x16xbf16>
    %c0_40 = arith.constant 0 : index
    %c0_41 = arith.constant 0 : index
    %c48_42 = arith.constant 48 : index
    %77 = vector.load %arg3[%c0_40, %c0_41, %c48_42] : memref<1x8x64xf32, #tpu.memory_space<vmem>>, vector<1x8x16xf32>
    %78 = vector.shape_cast %77 : vector<1x8x16xf32> to vector<8x16xf32>
    %79 = arith.truncf %78 : vector<8x16xf32> to vector<8x16xbf16>
    %c0_43 = arith.constant 0 : index
    %c0_44 = arith.constant 0 : index
    %c24 = arith.constant 24 : index
    %80 = vector.load %arg4[%c0_43, %c0_44, %c24] : memref<1x8x32xf32, #tpu.memory_space<vmem>>, vector<1x8x8xf32>
    %81 = vector.shape_cast %80 : vector<1x8x8xf32> to vector<8x8xf32>
    %82 = arith.truncf %81 : vector<8x8xf32> to vector<8x8xbf16>
    %cst_45 = arith.constant dense<0.000000e+00> : vector<8x8xf32>
    %83 = tpu.matmul %76, %79, %cst_45 {dimension_numbers = #tpu.dot_dimension_numbers<[1], [1], [0], [0], [0, 0, 1, 0], [], []>} : vector<8x16xbf16>, vector<8x16xbf16>, vector<8x8xf32> -> vector<8x8xf32>
    %cst_46 = arith.constant dense<0xFF800000> : vector<8xf32>
    %84 = vector.multi_reduction <maximumf>, %83, %cst_46 [1] : vector<8x8xf32> to vector<8xf32>
    %85 = vector.shape_cast %84 : vector<8xf32> to vector<8x1xf32>
    %86 = vector.broadcast %85 : vector<8x1xf32> to vector<8x8xf32>
    %87 = arith.subf %83, %86 : vector<8x8xf32>
    %88 = math.exp %87 : vector<8x8xf32>
    %cst_47 = arith.constant dense<0.000000e+00> : vector<8xf32>
    %89 = vector.multi_reduction <add>, %88, %cst_47 [1] : vector<8x8xf32> to vector<8xf32>
    %90 = vector.shape_cast %89 : vector<8xf32> to vector<8x1xf32>
    %91 = arith.truncf %88 : vector<8x8xf32> to vector<8x8xbf16>
    %cst_48 = arith.constant dense<0.000000e+00> : vector<8x8xf32>
    %92 = tpu.matmul %91, %82, %cst_48 {dimension_numbers = #tpu.dot_dimension_numbers<[1], [0], [0], [1], [0, 0, 1, 1], [], []>} : vector<8x8xbf16>, vector<8x8xbf16>, vector<8x8xf32> -> vector<8x8xf32>
    %93 = tpu.reciprocal %90 {approx = true} : vector<8x1xf32> -> vector<8x1xf32>
    %94 = vector.broadcast %93 : vector<8x1xf32> to vector<8x8xf32>
    %95 = arith.mulf %92, %94 : vector<8x8xf32>
    %96 = tpu.concatenate %23, %47, %71, %95 in 1 : vector<8x8xf32>, vector<8x8xf32>, vector<8x8xf32>, vector<8x8xf32> -> vector<8x32xf32>
    %c0_49 = arith.constant 0 : index
    %c0_50 = arith.constant 0 : index
    %c0_51 = arith.constant 0 : index
    %97 = vector.load %arg5[%c0_49, %c0_50, %c0_51] : memref<1x8x32xf32, #tpu.memory_space<vmem>>, vector<1x8x32xf32>
    %98 = vector.shape_cast %97 : vector<1x8x32xf32> to vector<8x32xf32>
    %99 = vector.shape_cast %96 : vector<8x32xf32> to vector<1x8x32xf32>
    tpu.vector_store %arg5[%c0_49, %c0_50, %c0_51], %99 {strides = array<i32>} : memref<1x8x32xf32, #tpu.memory_space<vmem>>, vector<1x8x32xf32>,
    return
  }
  func.func @transform_0(%arg0: i32, %arg1: i32) -> (i32, i32, i32) {
    %c0_i32 = arith.constant 0 : i32
    %c0_i32_0 = arith.constant 0 : i32
    return %arg0, %arg1, %c0_i32 : i32, i32, i32
  }
  func.func @transform_1(%arg0: i32, %arg1: i32) -> (i32, i32, i32) {
    %c0_i32 = arith.constant 0 : i32
    %c0_i32_0 = arith.constant 0 : i32
    %c0_i32_1 = arith.constant 0 : i32
    return %arg0, %c0_i32, %c0_i32_0 : i32, i32, i32
  }
  func.func @transform_2(%arg0: i32, %arg1: i32) -> (i32, i32, i32) {
    %c0_i32 = arith.constant 0 : i32
    %c0_i32_0 = arith.constant 0 : i32
    %c0_i32_1 = arith.constant 0 : i32
    return %arg0, %c0_i32, %c0_i32_0 : i32, i32, i32
  }
  func.func @transform_3(%arg0: i32, %arg1: i32) -> (i32, i32, i32) {
    %c0_i32 = arith.constant 0 : i32
    %c0_i32_0 = arith.constant 0 : i32
    return %arg0, %arg1, %c0_i32 : i32, i32, i32
  }
}

module attributes {stable_mosaic.version = 11 : i64} {
  func.func @_linear_kernel(%arg0: i32, %arg1: memref<16x32xf32, #tpu.memory_space<vmem>>, %arg2: memref<32x32xbf16, #tpu.memory_space<vmem>>, %arg3: memref<1x32xf32, #tpu.memory_space<vmem>>, %arg4: memref<16x32xf32, #tpu.memory_space<vmem>>) attributes {dimension_semantics = [#tpu.dimension_semantics<parallel>], iteration_bounds = array<i64: 1>, scalar_prefetch = 0 : i64, scratch_operands = 0 : i64, tpu.core_type = #tpu.core_type<tc>, window_params = [{transform_indices = @transform_0, window_bounds = array<i64: 16, 32>}, {pipeline_mode = #tpu.pipeline_mode<synchronous>, transform_indices = @transform_1, window_bounds = array<i64: 32, 32>}, {pipeline_mode = #tpu.pipeline_mode<synchronous>, transform_indices = @transform_2, window_bounds = array<i64: 1, 32>}, {transform_indices = @transform_3, window_bounds = array<i64: 16, 32>}]} {
    %c0 = arith.constant 0 : index
    %c0_0 = arith.constant 0 : index
    %0 = vector.load %arg1[%c0, %c0_0] : memref<16x32xf32, #tpu.memory_space<vmem>>, vector<16x32xf32>
    %1 = arith.truncf %0 : vector<16x32xf32> to vector<16x32xbf16>
    %c0_1 = arith.constant 0 : index
    %c0_2 = arith.constant 0 : index
    %2 = vector.load %arg2[%c0_1, %c0_2] : memref<32x32xbf16, #tpu.memory_space<vmem>>, vector<32x32xbf16>
    %cst = arith.constant dense<0.000000e+00> : vector<16x32xf32>
    %3 = tpu.matmul %1, %2, %cst {dimension_numbers = #tpu.dot_dimension_numbers<[1], [1], [0], [0], [0, 0, 1, 0], [], []>} : vector<16x32xbf16>, vector<32x32xbf16>, vector<16x32xf32> -> vector<16x32xf32>
    %c0_3 = arith.constant 0 : index
    %c0_4 = arith.constant 0 : index
    %4 = vector.load %arg3[%c0_3, %c0_4] : memref<1x32xf32, #tpu.memory_space<vmem>>, vector<1x32xf32>
    %5 = vector.broadcast %4 : vector<1x32xf32> to vector<16x32xf32>
    %6 = arith.addf %3, %5 : vector<16x32xf32>
    %c0_5 = arith.constant 0 : index
    %c0_6 = arith.constant 0 : index
    %7 = vector.load %arg4[%c0_5, %c0_6] : memref<16x32xf32, #tpu.memory_space<vmem>>, vector<16x32xf32>
    tpu.vector_store %arg4[%c0_5, %c0_6], %6 {strides = array<i32>} : memref<16x32xf32, #tpu.memory_space<vmem>>, vector<16x32xf32>,
    return
  }
  func.func @transform_0(%arg0: i32) -> (i32, i32) {
    %c0_i32 = arith.constant 0 : i32
    %c0_i32_0 = arith.constant 0 : i32
    return %arg0, %c0_i32 : i32, i32
  }
  func.func @transform_1(%arg0: i32) -> (i32, i32) {
    %c0_i32 = arith.constant 0 : i32
    %c0_i32_0 = arith.constant 0 : i32
    %c0_i32_1 = arith.constant 0 : i32
    return %c0_i32, %c0_i32_0 : i32, i32
  }
  func.func @transform_2(%arg0: i32) -> (i32, i32) {
    %c0_i32 = arith.constant 0 : i32
    %c0_i32_0 = arith.constant 0 : i32
    %c0_i32_1 = arith.constant 0 : i32
    return %c0_i32, %c0_i32_0 : i32, i32
  }
  func.func @transform_3(%arg0: i32) -> (i32, i32) {
    %c0_i32 = arith.constant 0 : i32
    %c0_i32_0 = arith.constant 0 : i32
    return %arg0, %c0_i32 : i32, i32
  }
}

</mosaic_0001>

<llo_original>
// kernel: attention_layer2_forward.6
$region0: #{attention_layer2_forward.6}
  #allocation0 [shape = 'u32[]', space=smem, size = 0x4, offset = 0x4, fixed_abs, tag = 'smem constant byte address 0x4 - core index']
  #allocation1 [shape = 'u32[144,128]{1,0:T(1,128)}', space=vmem, size = 0x12000, scoped, tag = 'internal scratch']
  %s0 = inlined_call_operand.vmem [shape: f32[16,32], index: 0, kind: input, shape index: {}]
  %s1 = inlined_call_operand.vmem [shape: f32[16,32], index: 1, kind: input, shape index: {}]
  %s2 = inlined_call_operand.vmem [shape: bf16[64,32], index: 2, kind: input, shape index: {}]
  %s3 = inlined_call_operand.vmem [shape: bf16[64,32], index: 3, kind: input, shape index: {}]
  %s4 = inlined_call_operand.vmem [shape: f32[1,64], index: 4, kind: input, shape index: {}]
  %s5 = inlined_call_operand.vmem [shape: f32[16,64], index: 5, kind: output, shape index: {}]
  %s6 = sld [smem:[#allocation0]]
  $region30: #{attention_layer2_forward.6} parent=0
    _
  %s8 = ssub.s32 1, %s6
  %s9 = scalar_select 0, %s8, %s6
  // Predicated region
  $region2: #{attention_layer2_forward.6} parent=0 // pred_check
    _
  $region3: #{attention_layer2_forward.6} parent=0 // pred_check_branch
    %11 = sbr.rel (0) target = $region5
  $region4: #{attention_layer2_forward.6} parent=0 // pred_region
    _
  $region5: #{attention_layer2_forward.6} parent=0 // pred_fallthru
    _
  // Predicated region
  $region6: #{attention_layer2_forward.6} parent=0 // pred_check
    _
  $region7: #{attention_layer2_forward.6} parent=0 // pred_check_branch
    %13 = sbr.rel (0) target = $region9
  $region8: #{attention_layer2_forward.6} parent=0 // pred_region
    _
  $region9: #{attention_layer2_forward.6} parent=0 // pred_fallthru
    _
  // Predicated region
  $region10: #{attention_layer2_forward.6} parent=0 // pred_check
    _
  $region11: #{attention_layer2_forward.6} parent=0 // pred_check_branch
    %15 = sbr.rel (0) target = $region13
  $region12: #{attention_layer2_forward.6} parent=0 // pred_region
    _
  $region13: #{attention_layer2_forward.6} parent=0 // pred_fallthru
    _
  // Predicated region
  $region14: #{attention_layer2_forward.6} parent=0 // pred_check
    _
  $region15: #{attention_layer2_forward.6} parent=0 // pred_check_branch
    %17 = sbr.rel (0) target = $region17
  $region16: #{attention_layer2_forward.6} parent=0 // pred_region
    _
  $region17: #{attention_layer2_forward.6} parent=0 // pred_fallthru
    _
  // Predicated region
  $region18: #{attention_layer2_forward.6} parent=0 // pred_check
    _
  $region19: #{attention_layer2_forward.6} parent=0 // pred_check_branch
    %19 = sbr.rel (0) target = $region21
  $region20: #{attention_layer2_forward.6} parent=0 // pred_region
    _
  $region21: #{attention_layer2_forward.6} parent=0 // pred_fallthru
    _
  %v21 = vld [vmem:[%s0] sm:$0xff]
  %v22 = vld [vmem:[%s0 + $0x8] sm:$0xff]
  %v23 = vpack.c.bf16 %v22, %v21
  %v24 = vld [vmem:[%s2] sm:$0xf]
  %v25 = vld [vmem:[%s2 + $0x4] sm:$0xf]
  %v26 = vld [vmem:[%s2 + $0x8] sm:$0xf]
  %v27 = vld [vmem:[%s2 + $0xc] sm:$0xf]
  %v28 = vld [vmem:[%s2 + $0x10] sm:$0xf]
  %v29 = vld [vmem:[%s2 + $0x14] sm:$0xf]
  %v30 = vld [vmem:[%s2 + $0x18] sm:$0xf]
  %v31 = vld [vmem:[%s2 + $0x1c] sm:$0xf]
  %v32 = vld [vmem:[%s1] sm:$0xff]
  %v33 = vld [vmem:[%s1 + $0x8] sm:$0xff]
  %v34 = vpack.c.bf16 %v33, %v32
  %v35 = vld [vmem:[%s3] sm:$0xf]
  %v36 = vld [vmem:[%s3 + $0x4] sm:$0xf]
  %v37 = vld [vmem:[%s3 + $0x8] sm:$0xf]
  %v38 = vld [vmem:[%s3 + $0xc] sm:$0xf]
  %v39 = vld [vmem:[%s3 + $0x10] sm:$0xf]
  %v40 = vld [vmem:[%s3 + $0x14] sm:$0xf]
  %v41 = vld [vmem:[%s3 + $0x18] sm:$0xf]
  %v42 = vld [vmem:[%s3 + $0x1c] sm:$0xf]
  %v51 = vunpack.c.l.b16 %v35
  %v52 = vunpack.c.l.b16 %v36
  %v53 = vunpack.c.l.b16 %v37
  %v54 = vunpack.c.l.b16 %v38
  %v55 = vunpack.c.l.b16 %v39
  %v56 = vunpack.c.l.b16 %v40
  %v57 = vunpack.c.l.b16 %v41
  %v58 = vunpack.c.l.b16 %v42
  %v59 = vpack.c.b16 %v52, %v51
  %v60 = vpack.c.b16 %v54, %v53
  %v61 = vpack.c.b16 %v56, %v55
  %v62 = vpack.c.b16 %v58, %v57
  %vm63 = vcmask 261120
  %v65 = vsel %vm63, %v34, 0
  %v68 = vsel %vm63, %v59, 0
  %v71 = vsel %vm63, %v60, 0
  %v74 = vsel %vm63, %v61, 0
  %v77 = vsel %vm63, %v62, 0
  %79 = vmatprep.subr.bf16.mxu0 0
  %80 = vmatpush1.bf16.xpose.msra.mxu0 %v68
  %81 = vmatprep.subr.bf16.mxu0 0
  %82 = vmatpush1.bf16.xpose.msra.mxu0 %v71
  %83 = vmatprep.subr.bf16.mxu0 0
  %84 = vmatpush1.bf16.xpose.msra.mxu0 %v74
  %85 = vmatprep.subr.bf16.mxu0 0
  %86 = vmatpush1.bf16.xpose.msra.mxu0 %v77
  %87 = vmatprep.subr.bf16.mxu0 0
  %88 = vmatpush1.bf16.xpose.msra.mxu0 0
  %89 = vmatprep.subr.bf16.mxu0 0
  %90 = vmatpush1.bf16.xpose.msra.mxu0 0
  %91 = vmatprep.subr.bf16.mxu0 0
  %92 = vmatpush1.bf16.xpose.msra.mxu0 0
  %93 = vmatprep.subr.bf16.mxu0 0
  %94 = vmatpush1.bf16.xpose.msra.mxu0 0
  %95 = vmatprep.subr.bf16.mxu0 0
  %96 = vmatpush1.bf16.xpose.msra.mxu0 0
  %97 = vmatprep.subr.bf16.mxu0 0
  %98 = vmatpush1.bf16.xpose.msra.mxu0 0
  %99 = vmatprep.subr.bf16.mxu0 0
  %100 = vmatpush1.bf16.xpose.msra.mxu0 0
  %101 = vmatprep.subr.bf16.mxu0 0
  %102 = vmatpush1.bf16.xpose.msra.mxu0 0
  %103 = vmatprep.subr.bf16.mxu0 0
  %104 = vmatpush1.bf16.xpose.msra.mxu0 0
  %105 = vmatprep.subr.bf16.mxu0 0
  %106 = vmatpush1.bf16.xpose.msra.mxu0 0
  %107 = vmatprep.subr.bf16.mxu0 0
  %108 = vmatpush1.bf16.xpose.msra.mxu0 0
  %109 = vmatprep.subr.bf16.mxu0 0
  %110 = vmatpush1.bf16.xpose.msra.mxu0 0
  %111 = vmatprep.mubr.bf16.mxu0 0
  %112 = vmatmul.mubr.bf16.gmra.mrb[0].mxu0 %v65
  %v113 = vpop.f32.mrb[0].mxu0
  %v114 = vadd.f32 0.0, %v113
  %v115 = vpop.f32.mrb[0].mxu0
  %v116 = vpop.f32.mrb[0].mxu0
  %v117 = vadd.f32 0.0, %v116
  %v118 = vpop.f32.mrb[0].mxu0
  %119 = vdwg.mxu0
  %v128 = vunpack.c.l.b16 %v24
  %v129 = vunpack.c.l.b16 %v25
  %v130 = vunpack.c.l.b16 %v26
  %v131 = vunpack.c.l.b16 %v27
  %v132 = vunpack.c.l.b16 %v28
  %v133 = vunpack.c.l.b16 %v29
  %v134 = vunpack.c.l.b16 %v30
  %v135 = vunpack.c.l.b16 %v31
  %v136 = vpack.c.b16 %v129, %v128
  %v137 = vpack.c.b16 %v131, %v130
  %v138 = vpack.c.b16 %v133, %v132
  %v139 = vpack.c.b16 %v135, %v134
  %v141 = vsel %vm63, %v23, 0
  %v144 = vsel %vm63, %v136, 0
  %v147 = vsel %vm63, %v137, 0
  %v150 = vsel %vm63, %v138, 0
  %v153 = vsel %vm63, %v139, 0
  %155 = vmatprep.subr.bf16.mxu0 0
  %156 = vmatpush1.bf16.xpose.msra.mxu0 %v144
  %157 = vmatprep.subr.bf16.mxu0 0
  %158 = vmatpush1.bf16.xpose.msra.mxu0 %v147
  %159 = vmatprep.subr.bf16.mxu0 0
  %160 = vmatpush1.bf16.xpose.msra.mxu0 %v150
  %161 = vmatprep.subr.bf16.mxu0 0
  %162 = vmatpush1.bf16.xpose.msra.mxu0 %v153
  %163 = vmatprep.subr.bf16.mxu0 0
  %164 = vmatpush1.bf16.xpose.msra.mxu0 0
  %165 = vmatprep.subr.bf16.mxu0 0
  %166 = vmatpush1.bf16.xpose.msra.mxu0 0
  %167 = vmatprep.subr.bf16.mxu0 0
  %168 = vmatpush1.bf16.xpose.msra.mxu0 0
  %169 = vmatprep.subr.bf16.mxu0 0
  %170 = vmatpush1.bf16.xpose.msra.mxu0 0
  %171 = vmatprep.subr.bf16.mxu0 0
  %172 = vmatpush1.bf16.xpose.msra.mxu0 0
  %173 = vmatprep.subr.bf16.mxu0 0
  %174 = vmatpush1.bf16.xpose.msra.mxu0 0
  %175 = vmatprep.subr.bf16.mxu0 0
  %176 = vmatpush1.bf16.xpose.msra.mxu0 0
  %177 = vmatprep.subr.bf16.mxu0 0
  %178 = vmatpush1.bf16.xpose.msra.mxu0 0
  %179 = vmatprep.subr.bf16.mxu0 0
  %180 = vmatpush1.bf16.xpose.msra.mxu0 0
  %181 = vmatprep.subr.bf16.mxu0 0
  %182 = vmatpush1.bf16.xpose.msra.mxu0 0
  %183 = vmatprep.subr.bf16.mxu0 0
  %184 = vmatpush1.bf16.xpose.msra.mxu0 0
  %185 = vmatprep.subr.bf16.mxu0 0
  %186 = vmatpush1.bf16.xpose.msra.mxu0 0
  %187 = vmatprep.mubr.bf16.mxu0 0
  %188 = vmatmul.mubr.bf16.gmra.mrb[0].mxu0 %v141
  %v189 = vpop.f32.mrb[0].mxu0
  %v190 = vadd.f32 %v114, %v189
  %v191 = vpop.f32.mrb[0].mxu0
  %v192 = vpop.f32.mrb[0].mxu0
  %v193 = vadd.f32 %v117, %v192
  %v194 = vpop.f32.mrb[0].mxu0
  %195 = vdwg.mxu0
  %v196 = vld [vmem:[%s4] sm:$0x1]
  %v198 = vlaneseq
  %v199 = vshrl.u32 %v198, 7
  %v200 = vsub.s32 0, %v199
  %v201 = vrot.slane %v196, %v200
  %v203 = vadd.f32 %v190, %v201
  %v204 = vadd.f32 %v193, %v201
  %vm205 = vcmask 523264
  %206 = vst.msk [vmem:[%s5] sm:$0xff] %vm205, %v203
  %207 = vst.msk [vmem:[%s5 + $0x8] sm:$0xff] %vm205, %v204
  // Predicated region
  $region22: #{attention_layer2_forward.6} parent=0 // pred_check
    _
  $region23: #{attention_layer2_forward.6} parent=0 // pred_check_branch
    %209 = sbr.rel (0) target = $region25
  $region24: #{attention_layer2_forward.6} parent=0 // pred_region
    _
  $region25: #{attention_layer2_forward.6} parent=0 // pred_fallthru
    _
  // Predicated region
  $region26: #{attention_layer2_forward.6} parent=0 // pred_check
    _
  $region27: #{attention_layer2_forward.6} parent=0 // pred_check_branch
    %211 = sbr.rel (0) target = $region29
  $region28: #{attention_layer2_forward.6} parent=0 // pred_region
    _
  $region29: #{attention_layer2_forward.6} parent=0 // pred_fallthru
    _

// kernel: attention_layer2_forward.9
$region0: #{attention_layer2_forward.9}
  #allocation0 [shape = 'u32[]', space=smem, size = 0x4, offset = 0x4, fixed_abs, tag = 'smem constant byte address 0x4 - core index']
  #allocation1 [shape = 'u32[144,128]{1,0:T(1,128)}', space=vmem, size = 0x12000, scoped, tag = 'internal scratch']
  %s0 = inlined_call_operand.vmem [shape: f32[16,32], index: 0, kind: input, shape index: {}]
  %s1 = inlined_call_operand.vmem [shape: bf16[32,32], index: 1, kind: input, shape index: {}]
  %s2 = inlined_call_operand.vmem [shape: f32[1,32], index: 2, kind: input, shape index: {}]
  %s3 = inlined_call_operand.hbm [shape: f32[16,32], index: 3, kind: output, shape index: {}]
  %s4 = sld [smem:[#allocation0]]
  $region22: #{attention_layer2_forward.9} parent=0
    _
  %s6 = ssub.s32 1, %s4
  %s7 = scalar_select 0, %s6, %s4
  $region1: #{attention_layer2_forward.9} parent=0
    #allocation2 [shape = 'u8[8192]{0}', space=vmem, size = 0x2000, scoped, tag = 'output window, operand 0, single buffered']
    #allocation3 [shape = 's32[1]{0}', space=sflag, size = 0x4, scoped, tag = 'scoped memory for attention_layer2_forward.9']
    %8 = vsyncpa [#allocation3], 0
    // Predicated region
    $region2: #{attention_layer2_forward.9} parent=1 // pred_check
      _
    $region3: #{attention_layer2_forward.9} parent=1 // pred_check_branch
      %10 = sbr.rel (0) target = $region5
    $region4: #{attention_layer2_forward.9} parent=1 // pred_region
      _
    $region5: #{attention_layer2_forward.9} parent=1 // pred_fallthru
      _
    // Predicated region
    $region6: #{attention_layer2_forward.9} parent=1 // pred_check
      _
    $region7: #{attention_layer2_forward.9} parent=1 // pred_check_branch
      %12 = sbr.rel (0) target = $region9
    $region8: #{attention_layer2_forward.9} parent=1 // pred_region
      _
    $region9: #{attention_layer2_forward.9} parent=1 // pred_fallthru
      _
    // Predicated region
    $region10: #{attention_layer2_forward.9} parent=1 // pred_check
      _
    $region11: #{attention_layer2_forward.9} parent=1 // pred_check_branch
      %14 = sbr.rel (0) target = $region13
    $region12: #{attention_layer2_forward.9} parent=1 // pred_region
      _
    $region13: #{attention_layer2_forward.9} parent=1 // pred_fallthru
      _
    %v16 = vld [vmem:[%s0] sm:$0xff]
    %v17 = vld [vmem:[%s0 + $0x8] sm:$0xff]
    %v18 = vpack.c.bf16 %v17, %v16
    %v19 = vld [vmem:[%s1] sm:$0xf]
    %v20 = vld [vmem:[%s1 + $0x4] sm:$0xf]
    %v21 = vld [vmem:[%s1 + $0x8] sm:$0xf]
    %v22 = vld [vmem:[%s1 + $0xc] sm:$0xf]
    %v23 = vld [vmem:[%s2] sm:$0x1]
    %v25 = vlaneseq
    %v26 = vshrl.u32 %v25, 7
    %v27 = vsub.s32 0, %v26
    %v28 = vrot.slane %v23, %v27
    %v34 = vunpack.c.l.b16 %v19
    %v35 = vunpack.c.l.b16 %v20
    %v36 = vunpack.c.l.b16 %v21
    %v37 = vunpack.c.l.b16 %v22
    %v38 = vpack.c.b16 %v35, %v34
    %v39 = vpack.c.b16 %v37, %v36
    %vm40 = vcmask 261120
    %v42 = vsel %vm40, %v18, 0
    %v45 = vsel %vm40, %v38, 0
    %v48 = vsel %vm40, %v39, 0
    %50 = vmatprep.subr.bf16.mxu0 0
    %51 = vmatpush1.bf16.xpose.msra.mxu0 %v45
    %52 = vmatprep.subr.bf16.mxu0 0
    %53 = vmatpush1.bf16.xpose.msra.mxu0 %v48
    %54 = vmatprep.subr.bf16.mxu0 0
    %55 = vmatpush1.bf16.xpose.msra.mxu0 0
    %56 = vmatprep.subr.bf16.mxu0 0
    %57 = vmatpush1.bf16.xpose.msra.mxu0 0
    %58 = vmatprep.subr.bf16.mxu0 0
    %59 = vmatpush1.bf16.xpose.msra.mxu0 0
    %60 = vmatprep.subr.bf16.mxu0 0
    %61 = vmatpush1.bf16.xpose.msra.mxu0 0
    %62 = vmatprep.subr.bf16.mxu0 0
    %63 = vmatpush1.bf16.xpose.msra.mxu0 0
    %64 = vmatprep.subr.bf16.mxu0 0
    %65 = vmatpush1.bf16.xpose.msra.mxu0 0
    %66 = vmatprep.subr.bf16.mxu0 0
    %67 = vmatpush1.bf16.xpose.msra.mxu0 0
    %68 = vmatprep.subr.bf16.mxu0 0
    %69 = vmatpush1.bf16.xpose.msra.mxu0 0
    %70 = vmatprep.subr.bf16.mxu0 0
    %71 = vmatpush1.bf16.xpose.msra.mxu0 0
    %72 = vmatprep.subr.bf16.mxu0 0
    %73 = vmatpush1.bf16.xpose.msra.mxu0 0
    %74 = vmatprep.subr.bf16.mxu0 0
    %75 = vmatpush1.bf16.xpose.msra.mxu0 0
    %76 = vmatprep.subr.bf16.mxu0 0
    %77 = vmatpush1.bf16.xpose.msra.mxu0 0
    %78 = vmatprep.subr.bf16.mxu0 0
    %79 = vmatpush1.bf16.xpose.msra.mxu0 0
    %80 = vmatprep.subr.bf16.mxu0 0
    %81 = vmatpush1.bf16.xpose.msra.mxu0 0
    %82 = vmatprep.mubr.bf16.mxu0 0
    %83 = vmatmul.mubr.bf16.gmra.mrb[0].mxu0 %v42
    %v84 = vpop.f32.mrb[0].mxu0
    %v85 = vadd.f32 %v28, %v84
    %v86 = vpop.f32.mrb[0].mxu0
    %v87 = vpop.f32.mrb[0].mxu0
    %v88 = vadd.f32 %v28, %v87
    %v89 = vpop.f32.mrb[0].mxu0
    %90 = vdwg.mxu0
    %91 = vst.msk [vmem:[#allocation2] sm:$0xff] %vm40, %v85
    %92 = vst.msk [vmem:[#allocation2 + $0x8] sm:$0xff] %vm40, %v88
    // Predicated region
    $region14: #{attention_layer2_forward.9} parent=1 // pred_check
      _
    $region15: #{attention_layer2_forward.9} parent=1 // pred_check_branch
      %94 = sbr.rel (0) target = $region17
    $region16: #{attention_layer2_forward.9} parent=1 // pred_region
      %s96 = ssub.s32 256, 256
      %97 = vsyncadd [#allocation3], %s96
      %s98 = sshll.u32 [#allocation2], 4
      %s99 = int_to_ptr.vmem [resolvable:$true] %s98
      %104 = dma.vmem_to_hbm [thread:$0]  %s99, 256, %s3, [#allocation3], 128, 128, 8
    $region17: #{attention_layer2_forward.9} parent=1 // pred_fallthru
      _
    // Predicated region
    $region18: #{attention_layer2_forward.9} parent=1 // pred_check
      _
    $region19: #{attention_layer2_forward.9} parent=1 // pred_check_branch
      %106 = sbr.rel (0) target = $region21
    $region20: #{attention_layer2_forward.9} parent=1 // pred_region
      %107 = dma.done [#allocation3], 256
    $region21: #{attention_layer2_forward.9} parent=1 // pred_fallthru
      _
    %108 = vsyncpa [#allocation3], 1

// kernel: attention_layer2_forward.7
$region0: #{attention_layer2_forward.7}
  #allocation0 [shape = 'u32[]', space=smem, size = 0x4, offset = 0x4, fixed_abs, tag = 'smem constant byte address 0x4 - core index']
  #allocation1 [shape = 'u32[144,128]{1,0:T(1,128)}', space=vmem, size = 0x12000, scoped, tag = 'internal scratch']
  %s0 = inlined_call_operand.vmem [shape: f32[16,32], index: 0, kind: input, shape index: {}]
  %s1 = inlined_call_operand.vmem [shape: bf16[32,32], index: 1, kind: input, shape index: {}]
  %s2 = inlined_call_operand.vmem [shape: f32[1,32], index: 2, kind: input, shape index: {}]
  %s3 = inlined_call_operand.vmem [shape: f32[16,32], index: 3, kind: output, shape index: {}]
  %s4 = sld [smem:[#allocation0]]
  $region22: #{attention_layer2_forward.7} parent=0
    _
  %s6 = ssub.s32 1, %s4
  %s7 = scalar_select 0, %s6, %s4
  // Predicated region
  $region2: #{attention_layer2_forward.7} parent=0 // pred_check
    _
  $region3: #{attention_layer2_forward.7} parent=0 // pred_check_branch
    %9 = sbr.rel (0) target = $region5
  $region4: #{attention_layer2_forward.7} parent=0 // pred_region
    _
  $region5: #{attention_layer2_forward.7} parent=0 // pred_fallthru
    _
  // Predicated region
  $region6: #{attention_layer2_forward.7} parent=0 // pred_check
    _
  $region7: #{attention_layer2_forward.7} parent=0 // pred_check_branch
    %11 = sbr.rel (0) target = $region9
  $region8: #{attention_layer2_forward.7} parent=0 // pred_region
    _
  $region9: #{attention_layer2_forward.7} parent=0 // pred_fallthru
    _
  // Predicated region
  $region10: #{attention_layer2_forward.7} parent=0 // pred_check
    _
  $region11: #{attention_layer2_forward.7} parent=0 // pred_check_branch
    %13 = sbr.rel (0) target = $region13
  $region12: #{attention_layer2_forward.7} parent=0 // pred_region
    _
  $region13: #{attention_layer2_forward.7} parent=0 // pred_fallthru
    _
  %v15 = vld [vmem:[%s0] sm:$0xff]
  %v16 = vld [vmem:[%s0 + $0x8] sm:$0xff]
  %v17 = vpack.c.bf16 %v16, %v15
  %v18 = vld [vmem:[%s1] sm:$0xf]
  %v19 = vld [vmem:[%s1 + $0x4] sm:$0xf]
  %v20 = vld [vmem:[%s1 + $0x8] sm:$0xf]
  %v21 = vld [vmem:[%s1 + $0xc] sm:$0xf]
  %v22 = vld [vmem:[%s2] sm:$0x1]
  %v24 = vlaneseq
  %v25 = vshrl.u32 %v24, 7
  %v26 = vsub.s32 0, %v25
  %v27 = vrot.slane %v22, %v26
  %v33 = vunpack.c.l.b16 %v18
  %v34 = vunpack.c.l.b16 %v19
  %v35 = vunpack.c.l.b16 %v20
  %v36 = vunpack.c.l.b16 %v21
  %v37 = vpack.c.b16 %v34, %v33
  %v38 = vpack.c.b16 %v36, %v35
  %vm39 = vcmask 261120
  %v41 = vsel %vm39, %v17, 0
  %v44 = vsel %vm39, %v37, 0
  %v47 = vsel %vm39, %v38, 0
  %49 = vmatprep.subr.bf16.mxu0 0
  %50 = vmatpush1.bf16.xpose.msra.mxu0 %v44
  %51 = vmatprep.subr.bf16.mxu0 0
  %52 = vmatpush1.bf16.xpose.msra.mxu0 %v47
  %53 = vmatprep.subr.bf16.mxu0 0
  %54 = vmatpush1.bf16.xpose.msra.mxu0 0
  %55 = vmatprep.subr.bf16.mxu0 0
  %56 = vmatpush1.bf16.xpose.msra.mxu0 0
  %57 = vmatprep.subr.bf16.mxu0 0
  %58 = vmatpush1.bf16.xpose.msra.mxu0 0
  %59 = vmatprep.subr.bf16.mxu0 0
  %60 = vmatpush1.bf16.xpose.msra.mxu0 0
  %61 = vmatprep.subr.bf16.mxu0 0
  %62 = vmatpush1.bf16.xpose.msra.mxu0 0
  %63 = vmatprep.subr.bf16.mxu0 0
  %64 = vmatpush1.bf16.xpose.msra.mxu0 0
  %65 = vmatprep.subr.bf16.mxu0 0
  %66 = vmatpush1.bf16.xpose.msra.mxu0 0
  %67 = vmatprep.subr.bf16.mxu0 0
  %68 = vmatpush1.bf16.xpose.msra.mxu0 0
  %69 = vmatprep.subr.bf16.mxu0 0
  %70 = vmatpush1.bf16.xpose.msra.mxu0 0
  %71 = vmatprep.subr.bf16.mxu0 0
  %72 = vmatpush1.bf16.xpose.msra.mxu0 0
  %73 = vmatprep.subr.bf16.mxu0 0
  %74 = vmatpush1.bf16.xpose.msra.mxu0 0
  %75 = vmatprep.subr.bf16.mxu0 0
  %76 = vmatpush1.bf16.xpose.msra.mxu0 0
  %77 = vmatprep.subr.bf16.mxu0 0
  %78 = vmatpush1.bf16.xpose.msra.mxu0 0
  %79 = vmatprep.subr.bf16.mxu0 0
  %80 = vmatpush1.bf16.xpose.msra.mxu0 0
  %81 = vmatprep.mubr.bf16.mxu0 0
  %82 = vmatmul.mubr.bf16.gmra.mrb[0].mxu0 %v41
  %v83 = vpop.f32.mrb[0].mxu0
  %v84 = vadd.f32 %v27, %v83
  %v85 = vpop.f32.mrb[0].mxu0
  %v86 = vpop.f32.mrb[0].mxu0
  %v87 = vadd.f32 %v27, %v86
  %v88 = vpop.f32.mrb[0].mxu0
  %89 = vdwg.mxu0
  %90 = vst.msk [vmem:[%s3] sm:$0xff] %vm39, %v84
  %91 = vst.msk [vmem:[%s3 + $0x8] sm:$0xff] %vm39, %v87
  // Predicated region
  $region14: #{attention_layer2_forward.7} parent=0 // pred_check
    _
  $region15: #{attention_layer2_forward.7} parent=0 // pred_check_branch
    %93 = sbr.rel (0) target = $region17
  $region16: #{attention_layer2_forward.7} parent=0 // pred_region
    _
  $region17: #{attention_layer2_forward.7} parent=0 // pred_fallthru
    _
  // Predicated region
  $region18: #{attention_layer2_forward.7} parent=0 // pred_check
    _
  $region19: #{attention_layer2_forward.7} parent=0 // pred_check_branch
    %95 = sbr.rel (0) target = $region21
  $region20: #{attention_layer2_forward.7} parent=0 // pred_region
    _
  $region21: #{attention_layer2_forward.7} parent=0 // pred_fallthru
    _

// kernel: attention_layer2_forward.8
$region0: #{attention_layer2_forward.8}
  #allocation0 [shape = 'u32[]', space=smem, size = 0x4, offset = 0x4, fixed_abs, tag = 'smem constant byte address 0x4 - core index']
  #allocation1 [shape = 'u32[144,128]{1,0:T(1,128)}', space=vmem, size = 0x12000, scoped, tag = 'internal scratch']
  %s0 = inlined_call_operand.vmem [shape: f32[2,8,64], index: 0, kind: input, shape index: {}]
  %s1 = inlined_call_operand.vmem [shape: f32[2,8,64], index: 1, kind: input, shape index: {}]
  %s2 = inlined_call_operand.vmem [shape: f32[2,8,32], index: 2, kind: input, shape index: {}]
  %s3 = inlined_call_operand.vmem [shape: f32[2,8,32], index: 3, kind: output, shape index: {}]
  %s4 = sld [smem:[#allocation0]]
  $region45: #{attention_layer2_forward.8} parent=0
    _
  %s6 = ssub.s32 1, %s4
  %s7 = scalar_select 0, %s6, %s4
  loop: start=0, step=1, limit=4
  $region2: #{attention_layer2_forward.8} parent=0 // loop_pre_header
    _
  $region3: #{attention_layer2_forward.8} parent=0 // loop_header
    %s9 = sphi 0, %s13
    %p10 = scmp.ge.s32.totalorder %s9, 4
    %s16 = sphi 0, %s28
    %s17 = sphi 0, %s24
    %s18 = sphi 0, %s16
    %s19 = sphi 0, %s17
    %s20 = sphi 0, %s18
    %s21 = sphi 0, %s19
    %s33 = sphi 0, %s35
    %s36 = sphi 0, %s33
    %s37 = sphi 0, %s36
    %s53 = sphi 0, %s37
    %s59 = sphi 0, %s61
    %s62 = sphi 0, %s59
    %s63 = sphi 0, %s62
    %s79 = sphi 0, %s63
    %s85 = sphi 0, %s87
    %s88 = sphi 0, %s85
    %s89 = sphi 0, %s88
    %s105 = sphi 0, %s89
    %s113 = sphi 0, %s115
    %s116 = sphi 0, %s113
    %s117 = sphi 0, %s116
    %s133 = sphi 0, %s117
  $region4: #{attention_layer2_forward.8} parent=0 // loop_header_branch
    %12 = sbr.rel (%p10) target = $region8
  $region5: #{attention_layer2_forward.8} parent=0 // loop_body
    %s14 = ssub.s32 %s9, 1
    %s15 = ssub.s32 %s9, 2
    %s22 = sadd.s32 1, %s17
    %p23 = scmp.ge.s32.totalorder %s22, 1
    %s24 = scalar_select %p23, 0, %s22
    %s25 = sadd.s32 1, %s16
    %s26 = scalar_select %p23, %s25, %s16
    %p27 = scmp.ge.s32.totalorder %s26, 2
    %s28 = scalar_select %p27, 0, %s26
    %s29 = ssub.s32 %s16, %s28
    %s30 = ssub.s32 %s17, %s24
    %s31 = sor.u32 %s29, %s30
    %p32 = scmp.eq.s32.totalorder %s31, 0
    %s34 = sadd.s32 %s33, 1
    %s35 = scalar_select %p32, %s33, %s34
    %p38 = pneg %p32
    %p39 = scmp.eq.s32.totalorder %s9, 1
    %p40 = por %p38, %p39
    %p41 = scmp.ne.s32.totalorder %s33, %s36
    %p42 = scmp.eq.s32.totalorder %s9, 0
    %p43 = por %p41, %p42
    %p44 = scmp.ne.s32.totalorder %s33, %s36
    %p45 = scmp.eq.s32.totalorder %s14, 1
    %p46 = por %p44, %p45
    %p47 = scmp.ne.s32.totalorder %s36, %s37
    %p48 = scmp.eq.s32.totalorder %s14, 0
    %p49 = por %p47, %p48
    %p50 = scmp.ne.s32.totalorder %s36, %s37
    %p51 = scmp.eq.s32.totalorder %s15, 1
    %p52 = por %p50, %p51
    %p54 = scmp.ne.s32.totalorder %s37, %s53
    %p55 = scmp.eq.s32.totalorder %s15, 0
    %p56 = por %p54, %p55
    %s57 = ssub.s32 %s16, %s28
    %p58 = scmp.eq.s32.totalorder %s57, 0
    %s60 = sadd.s32 %s59, 1
    %s61 = scalar_select %p58, %s59, %s60
    %p64 = pneg %p58
    %p65 = scmp.eq.s32.totalorder %s9, 1
    %p66 = por %p64, %p65
    %p67 = scmp.ne.s32.totalorder %s59, %s62
    %p68 = scmp.eq.s32.totalorder %s9, 0
    %p69 = por %p67, %p68
    %p70 = scmp.ne.s32.totalorder %s59, %s62
    %p71 = scmp.eq.s32.totalorder %s14, 1
    %p72 = por %p70, %p71
    %p73 = scmp.ne.s32.totalorder %s62, %s63
    %p74 = scmp.eq.s32.totalorder %s14, 0
    %p75 = por %p73, %p74
    %p76 = scmp.ne.s32.totalorder %s62, %s63
    %p77 = scmp.eq.s32.totalorder %s15, 1
    %p78 = por %p76, %p77
    %p80 = scmp.ne.s32.totalorder %s63, %s79
    %p81 = scmp.eq.s32.totalorder %s15, 0
    %p82 = por %p80, %p81
    %s83 = ssub.s32 %s16, %s28
    %p84 = scmp.eq.s32.totalorder %s83, 0
    %s86 = sadd.s32 %s85, 1
    %s87 = scalar_select %p84, %s85, %s86
    %p90 = pneg %p84
    %p91 = scmp.eq.s32.totalorder %s9, 1
    %p92 = por %p90, %p91
    %p93 = scmp.ne.s32.totalorder %s85, %s88
    %p94 = scmp.eq.s32.totalorder %s9, 0
    %p95 = por %p93, %p94
    %p96 = scmp.ne.s32.totalorder %s85, %s88
    %p97 = scmp.eq.s32.totalorder %s14, 1
    %p98 = por %p96, %p97
    %p99 = scmp.ne.s32.totalorder %s88, %s89
    %p100 = scmp.eq.s32.totalorder %s14, 0
    %p101 = por %p99, %p100
    %p102 = scmp.ne.s32.totalorder %s88, %s89
    %p103 = scmp.eq.s32.totalorder %s15, 1
    %p104 = por %p102, %p103
    %p106 = scmp.ne.s32.totalorder %s89, %s105
    %p107 = scmp.eq.s32.totalorder %s15, 0
    %p108 = por %p106, %p107
    %s109 = ssub.s32 %s16, %s28
    %s110 = ssub.s32 %s17, %s24
    %s111 = sor.u32 %s109, %s110
    %p112 = scmp.eq.s32.totalorder %s111, 0
    %s114 = sadd.s32 %s113, 1
    %s115 = scalar_select %p112, %s113, %s114
    %p118 = pneg %p112
    %p119 = scmp.eq.s32.totalorder %s9, 1
    %p120 = por %p118, %p119
    %p121 = scmp.ne.s32.totalorder %s113, %s116
    %p122 = scmp.eq.s32.totalorder %s9, 0
    %p123 = por %p121, %p122
    %p124 = scmp.ne.s32.totalorder %s113, %s116
    %p125 = scmp.eq.s32.totalorder %s14, 1
    %p126 = por %p124, %p125
    %p127 = scmp.ne.s32.totalorder %s116, %s117
    %p128 = scmp.eq.s32.totalorder %s14, 0
    %p129 = por %p127, %p128
    %p130 = scmp.ne.s32.totalorder %s116, %s117
    %p131 = scmp.eq.s32.totalorder %s15, 1
    %p132 = por %p130, %p131
    %p134 = scmp.ne.s32.totalorder %s117, %s133
    %p135 = scmp.eq.s32.totalorder %s15, 0
    %p136 = por %p134, %p135
    %p137 = scmp.le.s32.totalorder 1, %s9
    %p138 = scmp.lt.s32.totalorder %s9, 3
    %p139 = pnand %p137, %p138
    %p140 = pneg %p139
    // Predicated region
    $region9: #{attention_layer2_forward.8} parent=5 // pred_check
      _
    $region10: #{attention_layer2_forward.8} parent=5 // pred_check_branch
      %142 = sbr.rel (%p139) target = $region12
    $region11: #{attention_layer2_forward.8} parent=5 // pred_region
      %s143 = ssub.s32 %s9, 1
    $region12: #{attention_layer2_forward.8} parent=5 // pred_fallthru
      _
    %p144 = scmp.lt.s32.totalorder %s9, 2
    // Predicated region
    $region13: #{attention_layer2_forward.8} parent=5 // pred_check
      %p145 = pneg %p144
    $region14: #{attention_layer2_forward.8} parent=5 // pred_check_branch
      %147 = sbr.rel (%p145) target = $region16
    $region15: #{attention_layer2_forward.8} parent=5 // pred_region
      // Predicated region
      $region17: #{attention_layer2_forward.8} parent=15 // pred_check
        %p148 = pneg %p43
      $region18: #{attention_layer2_forward.8} parent=15 // pred_check_branch
        %150 = sbr.rel (%p148) target = $region20
      $region19: #{attention_layer2_forward.8} parent=15 // pred_region
        %p151 = scmp.lt.s32.totalorder %s16, 1
        %s152 = scalar_select %p151, %s16, 1
        %p153 = scmp.lt.s32.totalorder %s17, 0
        %s154 = scalar_select %p153, %s17, 0
        %s155 = sadd.s32 %s154, %s152
        %s156 = smul.addr %s155, 8
        %s157 = scalar_lea.vmem %s0, %s156
      $region20: #{attention_layer2_forward.8} parent=15 // pred_fallthru
        _
      // Predicated region
      $region21: #{attention_layer2_forward.8} parent=15 // pred_check
        %p158 = pneg %p69
      $region22: #{attention_layer2_forward.8} parent=15 // pred_check_branch
        %160 = sbr.rel (%p158) target = $region24
      $region23: #{attention_layer2_forward.8} parent=15 // pred_region
        %p161 = scmp.lt.s32.totalorder %s16, 1
        %s162 = scalar_select %p161, %s16, 1
        %s163 = smul.addr %s162, 8
        %s164 = scalar_lea.vmem %s1, %s163
      $region24: #{attention_layer2_forward.8} parent=15 // pred_fallthru
        _
      // Predicated region
      $region25: #{attention_layer2_forward.8} parent=15 // pred_check
        %p165 = pneg %p95
      $region26: #{attention_layer2_forward.8} parent=15 // pred_check_branch
        %167 = sbr.rel (%p165) target = $region28
      $region27: #{attention_layer2_forward.8} parent=15 // pred_region
        %p168 = scmp.lt.s32.totalorder %s16, 1
        %s169 = scalar_select %p168, %s16, 1
        %s170 = smul.addr %s169, 8
        %s171 = scalar_lea.vmem %s2, %s170
      $region28: #{attention_layer2_forward.8} parent=15 // pred_fallthru
        _
    $region16: #{attention_layer2_forward.8} parent=5 // pred_fallthru
      _
    %p172 = scmp.le.s32.totalorder 1, %s9
    %p173 = scmp.lt.s32.totalorder %s9, 3
    %p174 = pnand %p172, %p173
    %p175 = pneg %p174
    // Predicated region
    $region29: #{attention_layer2_forward.8} parent=5 // pred_check
      _
    $region30: #{attention_layer2_forward.8} parent=5 // pred_check_branch
      %177 = sbr.rel (%p174) target = $region32
    $region31: #{attention_layer2_forward.8} parent=5 // pred_region
      %s178 = ssub.s32 %s9, 1
      %p179 = scmp.lt.s32.totalorder %s18, 1
      %s180 = scalar_select %p179, %s18, 1
      %p181 = scmp.lt.s32.totalorder %s19, 0
      %s182 = scalar_select %p181, %s19, 0
      %s183 = sadd.s32 %s182, %s180
      %s184 = smul.addr %s183, 8
      %s185 = scalar_lea.vmem %s0, %s184
      %p186 = pneg %p49
      %p187 = pneg %p46
      %p188 = scmp.lt.s32.totalorder %s18, 1
      %s189 = scalar_select %p188, %s18, 1
      %s190 = smul.addr %s189, 8
      %s191 = scalar_lea.vmem %s1, %s190
      %p192 = pneg %p75
      %p193 = pneg %p72
      %p194 = scmp.lt.s32.totalorder %s18, 1
      %s195 = scalar_select %p194, %s18, 1
      %s196 = smul.addr %s195, 8
      %s197 = scalar_lea.vmem %s2, %s196
      %p198 = pneg %p101
      %p199 = pneg %p98
      %p200 = pneg %p129
      %p201 = pneg %p126
      %p202 = scmp.lt.s32.totalorder %s18, 1
      %s203 = scalar_select %p202, %s18, 1
      %p204 = scmp.lt.s32.totalorder %s19, 0
      %s205 = scalar_select %p204, %s19, 0
      %s206 = sadd.s32 %s205, %s203
      %s207 = smul.addr %s206, 8
      %s208 = scalar_lea.vmem %s3, %s207
      %p209 = scmp.lt.s32.totalorder %s18, 1
      %s210 = scalar_select %p209, %s18, 1
      %p211 = scmp.lt.s32.totalorder %s19, 0
      %s212 = scalar_select %p211, %s19, 0
      %s213 = sadd.s32 %s212, %s210
      %s214 = smul.addr %s213, 8
      %s215 = scalar_lea.vmem %s0, %s214
      %p216 = scmp.lt.s32.totalorder %s18, 1
      %s217 = scalar_select %p216, %s18, 1
      %s218 = smul.addr %s217, 8
      %s219 = scalar_lea.vmem %s1, %s218
      %p220 = scmp.lt.s32.totalorder %s18, 1
      %s221 = scalar_select %p220, %s18, 1
      %s222 = smul.addr %s221, 8
      %s223 = scalar_lea.vmem %s2, %s222
      %p224 = scmp.lt.s32.totalorder %s18, 1
      %s225 = scalar_select %p224, %s18, 1
      %p226 = scmp.lt.s32.totalorder %s19, 0
      %s227 = scalar_select %p226, %s19, 0
      %s228 = sadd.s32 %s227, %s225
      %s229 = smul.addr %s228, 8
      %s230 = scalar_lea.vmem %s3, %s229
      %v232 = vld [vmem:[%s215] sm:$0xff]
      %v233 = vmul.f32 %v232, 0.35355338
      %v234 = vpack.c.bf16 %v233, %v233
      %v235 = vld [vmem:[%s219] sm:$0xff]
      %v236 = vpack.c.bf16 %v235, %v235
      %v237 = vld [vmem:[%s223] sm:$0xff]
      %v238 = vpack.c.bf16 %v237, %v237
      %vm239 = vcmask 130048
      %v241 = vsel %vm239, %v234, 0
      %v244 = vsel %vm239, %v236, 0
      %246 = vmatprep.subr.bf16.mxu0 0
      %247 = vmatpush1.bf16.xpose.msra.mxu0 %v244
      %248 = vmatprep.subr.bf16.mxu0 0
      %249 = vmatpush1.bf16.xpose.msra.mxu0 0
      %250 = vmatprep.subr.bf16.mxu0 0
      %251 = vmatpush1.bf16.xpose.msra.mxu0 0
      %252 = vmatprep.subr.bf16.mxu0 0
      %253 = vmatpush1.bf16.xpose.msra.mxu0 0
      %254 = vmatprep.subr.bf16.mxu0 0
      %255 = vmatpush1.bf16.xpose.msra.mxu0 0
      %256 = vmatprep.subr.bf16.mxu0 0
      %257 = vmatpush1.bf16.xpose.msra.mxu0 0
      %258 = vmatprep.subr.bf16.mxu0 0
      %259 = vmatpush1.bf16.xpose.msra.mxu0 0
      %260 = vmatprep.subr.bf16.mxu0 0
      %261 = vmatpush1.bf16.xpose.msra.mxu0 0
      %262 = vmatprep.subr.bf16.mxu0 0
      %263 = vmatpush1.bf16.xpose.msra.mxu0 0
      %264 = vmatprep.subr.bf16.mxu0 0
      %265 = vmatpush1.bf16.xpose.msra.mxu0 0
      %266 = vmatprep.subr.bf16.mxu0 0
      %267 = vmatpush1.bf16.xpose.msra.mxu0 0
      %268 = vmatprep.subr.bf16.mxu0 0
      %269 = vmatpush1.bf16.xpose.msra.mxu0 0
      %270 = vmatprep.subr.bf16.mxu0 0
      %271 = vmatpush1.bf16.xpose.msra.mxu0 0
      %272 = vmatprep.subr.bf16.mxu0 0
      %273 = vmatpush1.bf16.xpose.msra.mxu0 0
      %274 = vmatprep.subr.bf16.mxu0 0
      %275 = vmatpush1.bf16.xpose.msra.mxu0 0
      %276 = vmatprep.subr.bf16.mxu0 0
      %277 = vmatpush1.bf16.xpose.msra.mxu0 0
      %278 = vmatprep.mubr.bf16.mxu0 0
      %279 = vmatmul.mubr.bf16.gmra.mrb[0].mxu0 %v241
      %v280 = vpop.f32.mrb[0].mxu0
      %v281 = vadd.f32 0.0, %v280
      %v282 = vpop.f32.mrb[0].mxu0
      %v283 = vpop.f32.mrb[0].mxu0
      %v284 = vpop.f32.mrb[0].mxu0
      %285 = vdwg.mxu0
      %vm286 = vcmask 64512
      %v287 = vsel %vm286, %v281, -inf
      %288 = vmax.xlane.f32.xlu0 %v287
      %v289 = vpop.xlane.xlu0 %288
      %v290 = vsub.f32 %v281, %v289
      %v291 = vmul.f32 %v290, 1.442695
      %v292 = vpow.pop %v291
      %v293 = vsel %vm286, %v292, 0.0
      %294 = vadd.xlane.f32.xlu0 %v293
      %v295 = vpop.xlane.xlu0 %294
      %v296 = vpack.c.bf16 %v292, %v292
      %v298 = vsel %vm286, %v296, 0
      %vm300 = vcmask 1043456
      %v302 = vsel %vm300, %v238, 0
      %304 = vmatprep.subr.bf16.mxu0 0
      %305 = vmatpush1.bf16.msra.mxu0 %v302
      %306 = vmatprep.subr.bf16.mxu0 0
      %307 = vmatpush1.bf16.msra.mxu0 0
      %308 = vmatprep.subr.bf16.mxu0 0
      %309 = vmatpush1.bf16.msra.mxu0 0
      %310 = vmatprep.subr.bf16.mxu0 0
      %311 = vmatpush1.bf16.msra.mxu0 0
      %312 = vmatprep.subr.bf16.mxu0 0
      %313 = vmatpush1.bf16.msra.mxu0 0
      %314 = vmatprep.subr.bf16.mxu0 0
      %315 = vmatpush1.bf16.msra.mxu0 0
      %316 = vmatprep.subr.bf16.mxu0 0
      %317 = vmatpush1.bf16.msra.mxu0 0
      %318 = vmatprep.subr.bf16.mxu0 0
      %319 = vmatpush1.bf16.msra.mxu0 0
      %320 = vmatprep.subr.bf16.mxu0 0
      %321 = vmatpush1.bf16.msra.mxu0 0
      %322 = vmatprep.subr.bf16.mxu0 0
      %323 = vmatpush1.bf16.msra.mxu0 0
      %324 = vmatprep.subr.bf16.mxu0 0
      %325 = vmatpush1.bf16.msra.mxu0 0
      %326 = vmatprep.subr.bf16.mxu0 0
      %327 = vmatpush1.bf16.msra.mxu0 0
      %328 = vmatprep.subr.bf16.mxu0 0
      %329 = vmatpush1.bf16.msra.mxu0 0
      %330 = vmatprep.subr.bf16.mxu0 0
      %331 = vmatpush1.bf16.msra.mxu0 0
      %332 = vmatprep.subr.bf16.mxu0 0
      %333 = vmatpush1.bf16.msra.mxu0 0
      %334 = vmatprep.subr.bf16.mxu0 0
      %335 = vmatpush1.bf16.msra.mxu0 0
      %336 = vmatprep.mubr.bf16.mxu0 0
      %337 = vmatmul.mubr.bf16.gmra.mrb[0].mxu0 %v298
      %v338 = vpop.f32.mrb[0].mxu0
      %v339 = vadd.f32 0.0, %v338
      %v340 = vpop.f32.mrb[0].mxu0
      %v341 = vpop.f32.mrb[0].mxu0
      %v342 = vpop.f32.mrb[0].mxu0
      %343 = vdwg.mxu0
      %v344 = vrcp.pop %v295
      %v345 = vmul.f32 %v339, %v344
      %347 = vrot.lane.b32.xlu0 %v234, 112
      %v348 = vpop.permute.xlu0 %347
      %350 = vrot.lane.b32.xlu0 %v236, 112
      %v351 = vpop.permute.xlu0 %350
      %v353 = vsel %vm239, %v348, 0
      %v356 = vsel %vm239, %v351, 0
      %358 = vmatprep.subr.bf16.mxu0 0
      %359 = vmatpush1.bf16.xpose.msra.mxu0 %v356
      %360 = vmatprep.subr.bf16.mxu0 0
      %361 = vmatpush1.bf16.xpose.msra.mxu0 0
      %362 = vmatprep.subr.bf16.mxu0 0
      %363 = vmatpush1.bf16.xpose.msra.mxu0 0
      %364 = vmatprep.subr.bf16.mxu0 0
      %365 = vmatpush1.bf16.xpose.msra.mxu0 0
      %366 = vmatprep.subr.bf16.mxu0 0
      %367 = vmatpush1.bf16.xpose.msra.mxu0 0
      %368 = vmatprep.subr.bf16.mxu0 0
      %369 = vmatpush1.bf16.xpose.msra.mxu0 0
      %370 = vmatprep.subr.bf16.mxu0 0
      %371 = vmatpush1.bf16.xpose.msra.mxu0 0
      %372 = vmatprep.subr.bf16.mxu0 0
      %373 = vmatpush1.bf16.xpose.msra.mxu0 0
      %374 = vmatprep.subr.bf16.mxu0 0
      %375 = vmatpush1.bf16.xpose.msra.mxu0 0
      %376 = vmatprep.subr.bf16.mxu0 0
      %377 = vmatpush1.bf16.xpose.msra.mxu0 0
      %378 = vmatprep.subr.bf16.mxu0 0
      %379 = vmatpush1.bf16.xpose.msra.mxu0 0
      %380 = vmatprep.subr.bf16.mxu0 0
      %381 = vmatpush1.bf16.xpose.msra.mxu0 0
      %382 = vmatprep.subr.bf16.mxu0 0
      %383 = vmatpush1.bf16.xpose.msra.mxu0 0
      %384 = vmatprep.subr.bf16.mxu0 0
      %385 = vmatpush1.bf16.xpose.msra.mxu0 0
      %386 = vmatprep.subr.bf16.mxu0 0
      %387 = vmatpush1.bf16.xpose.msra.mxu0 0
      %388 = vmatprep.subr.bf16.mxu0 0
      %389 = vmatpush1.bf16.xpose.msra.mxu0 0
      %390 = vmatprep.mubr.bf16.mxu0 0
      %391 = vmatmul.mubr.bf16.gmra.mrb[0].mxu0 %v353
      %v392 = vpop.f32.mrb[0].mxu0
      %v393 = vadd.f32 0.0, %v392
      %v394 = vpop.f32.mrb[0].mxu0
      %v395 = vpop.f32.mrb[0].mxu0
      %v396 = vpop.f32.mrb[0].mxu0
      %397 = vdwg.mxu0
      %v398 = vsel %vm286, %v393, -inf
      %399 = vmax.xlane.f32.xlu0 %v398
      %v400 = vpop.xlane.xlu0 %399
      %v401 = vsub.f32 %v393, %v400
      %v402 = vmul.f32 %v401, 1.442695
      %v403 = vpow.pop %v402
      %v404 = vsel %vm286, %v403, 0.0
      %405 = vadd.xlane.f32.xlu0 %v404
      %v406 = vpop.xlane.xlu0 %405
      %v407 = vpack.c.bf16 %v403, %v403
      %409 = vrot.lane.b32.xlu0 %v238, 120
      %v410 = vpop.permute.xlu0 %409
      %v412 = vsel %vm286, %v407, 0
      %v415 = vsel %vm300, %v410, 0
      %417 = vmatprep.subr.bf16.mxu0 0
      %418 = vmatpush1.bf16.msra.mxu0 %v415
      %419 = vmatprep.subr.bf16.mxu0 0
      %420 = vmatpush1.bf16.msra.mxu0 0
      %421 = vmatprep.subr.bf16.mxu0 0
      %422 = vmatpush1.bf16.msra.mxu0 0
      %423 = vmatprep.subr.bf16.mxu0 0
      %424 = vmatpush1.bf16.msra.mxu0 0
      %425 = vmatprep.subr.bf16.mxu0 0
      %426 = vmatpush1.bf16.msra.mxu0 0
      %427 = vmatprep.subr.bf16.mxu0 0
      %428 = vmatpush1.bf16.msra.mxu0 0
      %429 = vmatprep.subr.bf16.mxu0 0
      %430 = vmatpush1.bf16.msra.mxu0 0
      %431 = vmatprep.subr.bf16.mxu0 0
      %432 = vmatpush1.bf16.msra.mxu0 0
      %433 = vmatprep.subr.bf16.mxu0 0
      %434 = vmatpush1.bf16.msra.mxu0 0
      %435 = vmatprep.subr.bf16.mxu0 0
      %436 = vmatpush1.bf16.msra.mxu0 0
      %437 = vmatprep.subr.bf16.mxu0 0
      %438 = vmatpush1.bf16.msra.mxu0 0
      %439 = vmatprep.subr.bf16.mxu0 0
      %440 = vmatpush1.bf16.msra.mxu0 0
      %441 = vmatprep.subr.bf16.mxu0 0
      %442 = vmatpush1.bf16.msra.mxu0 0
      %443 = vmatprep.subr.bf16.mxu0 0
      %444 = vmatpush1.bf16.msra.mxu0 0
      %445 = vmatprep.subr.bf16.mxu0 0
      %446 = vmatpush1.bf16.msra.mxu0 0
      %447 = vmatprep.subr.bf16.mxu0 0
      %448 = vmatpush1.bf16.msra.mxu0 0
      %449 = vmatprep.mubr.bf16.mxu0 0
      %450 = vmatmul.mubr.bf16.gmra.mrb[0].mxu0 %v412
      %v451 = vpop.f32.mrb[0].mxu0
      %v452 = vadd.f32 0.0, %v451
      %v453 = vpop.f32.mrb[0].mxu0
      %v454 = vpop.f32.mrb[0].mxu0
      %v455 = vpop.f32.mrb[0].mxu0
      %456 = vdwg.mxu0
      %v457 = vrcp.pop %v406
      %v458 = vmul.f32 %v452, %v457
      %459 = vrot.lane.b32.xlu0 %v234, 96
      %v460 = vpop.permute.xlu0 %459
      %461 = vrot.lane.b32.xlu0 %v236, 96
      %v462 = vpop.permute.xlu0 %461
      %v464 = vsel %vm239, %v460, 0
      %v467 = vsel %vm239, %v462, 0
      %469 = vmatprep.subr.bf16.mxu0 0
      %470 = vmatpush1.bf16.xpose.msra.mxu0 %v467
      %471 = vmatprep.subr.bf16.mxu0 0
      %472 = vmatpush1.bf16.xpose.msra.mxu0 0
      %473 = vmatprep.subr.bf16.mxu0 0
      %474 = vmatpush1.bf16.xpose.msra.mxu0 0
      %475 = vmatprep.subr.bf16.mxu0 0
      %476 = vmatpush1.bf16.xpose.msra.mxu0 0
      %477 = vmatprep.subr.bf16.mxu0 0
      %478 = vmatpush1.bf16.xpose.msra.mxu0 0
      %479 = vmatprep.subr.bf16.mxu0 0
      %480 = vmatpush1.bf16.xpose.msra.mxu0 0
      %481 = vmatprep.subr.bf16.mxu0 0
      %482 = vmatpush1.bf16.xpose.msra.mxu0 0
      %483 = vmatprep.subr.bf16.mxu0 0
      %484 = vmatpush1.bf16.xpose.msra.mxu0 0
      %485 = vmatprep.subr.bf16.mxu0 0
      %486 = vmatpush1.bf16.xpose.msra.mxu0 0
      %487 = vmatprep.subr.bf16.mxu0 0
      %488 = vmatpush1.bf16.xpose.msra.mxu0 0
      %489 = vmatprep.subr.bf16.mxu0 0
      %490 = vmatpush1.bf16.xpose.msra.mxu0 0
      %491 = vmatprep.subr.bf16.mxu0 0
      %492 = vmatpush1.bf16.xpose.msra.mxu0 0
      %493 = vmatprep.subr.bf16.mxu0 0
      %494 = vmatpush1.bf16.xpose.msra.mxu0 0
      %495 = vmatprep.subr.bf16.mxu0 0
      %496 = vmatpush1.bf16.xpose.msra.mxu0 0
      %497 = vmatprep.subr.bf16.mxu0 0
      %498 = vmatpush1.bf16.xpose.msra.mxu0 0
      %499 = vmatprep.subr.bf16.mxu0 0
      %500 = vmatpush1.bf16.xpose.msra.mxu0 0
      %501 = vmatprep.mubr.bf16.mxu0 0
      %502 = vmatmul.mubr.bf16.gmra.mrb[0].mxu0 %v464
      %v503 = vpop.f32.mrb[0].mxu0
      %v504 = vadd.f32 0.0, %v503
      %v505 = vpop.f32.mrb[0].mxu0
      %v506 = vpop.f32.mrb[0].mxu0
      %v507 = vpop.f32.mrb[0].mxu0
      %508 = vdwg.mxu0
      %v509 = vsel %vm286, %v504, -inf
      %510 = vmax.xlane.f32.xlu0 %v509
      %v511 = vpop.xlane.xlu0 %510
      %v512 = vsub.f32 %v504, %v511
      %v513 = vmul.f32 %v512, 1.442695
      %v514 = vpow.pop %v513
      %v515 = vsel %vm286, %v514, 0.0
      %516 = vadd.xlane.f32.xlu0 %v515
      %v517 = vpop.xlane.xlu0 %516
      %v518 = vpack.c.bf16 %v514, %v514
      %519 = vrot.lane.b32.xlu0 %v238, 112
      %v520 = vpop.permute.xlu0 %519
      %v522 = vsel %vm286, %v518, 0
      %v525 = vsel %vm300, %v520, 0
      %527 = vmatprep.subr.bf16.mxu0 0
      %528 = vmatpush1.bf16.msra.mxu0 %v525
      %529 = vmatprep.subr.bf16.mxu0 0
      %530 = vmatpush1.bf16.msra.mxu0 0
      %531 = vmatprep.subr.bf16.mxu0 0
      %532 = vmatpush1.bf16.msra.mxu0 0
      %533 = vmatprep.subr.bf16.mxu0 0
      %534 = vmatpush1.bf16.msra.mxu0 0
      %535 = vmatprep.subr.bf16.mxu0 0
      %536 = vmatpush1.bf16.msra.mxu0 0
      %537 = vmatprep.subr.bf16.mxu0 0
      %538 = vmatpush1.bf16.msra.mxu0 0
      %539 = vmatprep.subr.bf16.mxu0 0
      %540 = vmatpush1.bf16.msra.mxu0 0
      %541 = vmatprep.subr.bf16.mxu0 0
      %542 = vmatpush1.bf16.msra.mxu0 0
      %543 = vmatprep.subr.bf16.mxu0 0
      %544 = vmatpush1.bf16.msra.mxu0 0
      %545 = vmatprep.subr.bf16.mxu0 0
      %546 = vmatpush1.bf16.msra.mxu0 0
      %547 = vmatprep.subr.bf16.mxu0 0
      %548 = vmatpush1.bf16.msra.mxu0 0
      %549 = vmatprep.subr.bf16.mxu0 0
      %550 = vmatpush1.bf16.msra.mxu0 0
      %551 = vmatprep.subr.bf16.mxu0 0
      %552 = vmatpush1.bf16.msra.mxu0 0
      %553 = vmatprep.subr.bf16.mxu0 0
      %554 = vmatpush1.bf16.msra.mxu0 0
      %555 = vmatprep.subr.bf16.mxu0 0
      %556 = vmatpush1.bf16.msra.mxu0 0
      %557 = vmatprep.subr.bf16.mxu0 0
      %558 = vmatpush1.bf16.msra.mxu0 0
      %559 = vmatprep.mubr.bf16.mxu0 0
      %560 = vmatmul.mubr.bf16.gmra.mrb[0].mxu0 %v522
      %v561 = vpop.f32.mrb[0].mxu0
      %v562 = vadd.f32 0.0, %v561
      %v563 = vpop.f32.mrb[0].mxu0
      %v564 = vpop.f32.mrb[0].mxu0
      %v565 = vpop.f32.mrb[0].mxu0
      %566 = vdwg.mxu0
      %v567 = vrcp.pop %v517
      %v568 = vmul.f32 %v562, %v567
      %569 = vrot.lane.b32.xlu0 %v234, 80
      %v570 = vpop.permute.xlu0 %569
      %571 = vrot.lane.b32.xlu0 %v236, 80
      %v572 = vpop.permute.xlu0 %571
      %v574 = vsel %vm239, %v570, 0
      %v577 = vsel %vm239, %v572, 0
      %579 = vmatprep.subr.bf16.mxu0 0
      %580 = vmatpush1.bf16.xpose.msra.mxu0 %v577
      %581 = vmatprep.subr.bf16.mxu0 0
      %582 = vmatpush1.bf16.xpose.msra.mxu0 0
      %583 = vmatprep.subr.bf16.mxu0 0
      %584 = vmatpush1.bf16.xpose.msra.mxu0 0
      %585 = vmatprep.subr.bf16.mxu0 0
      %586 = vmatpush1.bf16.xpose.msra.mxu0 0
      %587 = vmatprep.subr.bf16.mxu0 0
      %588 = vmatpush1.bf16.xpose.msra.mxu0 0
      %589 = vmatprep.subr.bf16.mxu0 0
      %590 = vmatpush1.bf16.xpose.msra.mxu0 0
      %591 = vmatprep.subr.bf16.mxu0 0
      %592 = vmatpush1.bf16.xpose.msra.mxu0 0
      %593 = vmatprep.subr.bf16.mxu0 0
      %594 = vmatpush1.bf16.xpose.msra.mxu0 0
      %595 = vmatprep.subr.bf16.mxu0 0
      %596 = vmatpush1.bf16.xpose.msra.mxu0 0
      %597 = vmatprep.subr.bf16.mxu0 0
      %598 = vmatpush1.bf16.xpose.msra.mxu0 0
      %599 = vmatprep.subr.bf16.mxu0 0
      %600 = vmatpush1.bf16.xpose.msra.mxu0 0
      %601 = vmatprep.subr.bf16.mxu0 0
      %602 = vmatpush1.bf16.xpose.msra.mxu0 0
      %603 = vmatprep.subr.bf16.mxu0 0
      %604 = vmatpush1.bf16.xpose.msra.mxu0 0
      %605 = vmatprep.subr.bf16.mxu0 0
      %606 = vmatpush1.bf16.xpose.msra.mxu0 0
      %607 = vmatprep.subr.bf16.mxu0 0
      %608 = vmatpush1.bf16.xpose.msra.mxu0 0
      %609 = vmatprep.subr.bf16.mxu0 0
      %610 = vmatpush1.bf16.xpose.msra.mxu0 0
      %611 = vmatprep.mubr.bf16.mxu0 0
      %612 = vmatmul.mubr.bf16.gmra.mrb[0].mxu0 %v574
      %v613 = vpop.f32.mrb[0].mxu0
      %v614 = vadd.f32 0.0, %v613
      %v615 = vpop.f32.mrb[0].mxu0
      %v616 = vpop.f32.mrb[0].mxu0
      %v617 = vpop.f32.mrb[0].mxu0
      %618 = vdwg.mxu0
      %v619 = vsel %vm286, %v614, -inf
      %620 = vmax.xlane.f32.xlu0 %v619
      %v621 = vpop.xlane.xlu0 %620
      %v622 = vsub.f32 %v614, %v621
      %v623 = vmul.f32 %v622, 1.442695
      %v624 = vpow.pop %v623
      %v625 = vsel %vm286, %v624, 0.0
      %626 = vadd.xlane.f32.xlu0 %v625
      %v627 = vpop.xlane.xlu0 %626
      %v628 = vpack.c.bf16 %v624, %v624
      %629 = vrot.lane.b32.xlu0 %v238, 104
      %v630 = vpop.permute.xlu0 %629
      %v632 = vsel %vm286, %v628, 0
      %v635 = vsel %vm300, %v630, 0
      %637 = vmatprep.subr.bf16.mxu0 0
      %638 = vmatpush1.bf16.msra.mxu0 %v635
      %639 = vmatprep.subr.bf16.mxu0 0
      %640 = vmatpush1.bf16.msra.mxu0 0
      %641 = vmatprep.subr.bf16.mxu0 0
      %642 = vmatpush1.bf16.msra.mxu0 0
      %643 = vmatprep.subr.bf16.mxu0 0
      %644 = vmatpush1.bf16.msra.mxu0 0
      %645 = vmatprep.subr.bf16.mxu0 0
      %646 = vmatpush1.bf16.msra.mxu0 0
      %647 = vmatprep.subr.bf16.mxu0 0
      %648 = vmatpush1.bf16.msra.mxu0 0
      %649 = vmatprep.subr.bf16.mxu0 0
      %650 = vmatpush1.bf16.msra.mxu0 0
      %651 = vmatprep.subr.bf16.mxu0 0
      %652 = vmatpush1.bf16.msra.mxu0 0
      %653 = vmatprep.subr.bf16.mxu0 0
      %654 = vmatpush1.bf16.msra.mxu0 0
      %655 = vmatprep.subr.bf16.mxu0 0
      %656 = vmatpush1.bf16.msra.mxu0 0
      %657 = vmatprep.subr.bf16.mxu0 0
      %658 = vmatpush1.bf16.msra.mxu0 0
      %659 = vmatprep.subr.bf16.mxu0 0
      %660 = vmatpush1.bf16.msra.mxu0 0
      %661 = vmatprep.subr.bf16.mxu0 0
      %662 = vmatpush1.bf16.msra.mxu0 0
      %663 = vmatprep.subr.bf16.mxu0 0
      %664 = vmatpush1.bf16.msra.mxu0 0
      %665 = vmatprep.subr.bf16.mxu0 0
      %666 = vmatpush1.bf16.msra.mxu0 0
      %667 = vmatprep.subr.bf16.mxu0 0
      %668 = vmatpush1.bf16.msra.mxu0 0
      %669 = vmatprep.mubr.bf16.mxu0 0
      %670 = vmatmul.mubr.bf16.gmra.mrb[0].mxu0 %v632
      %v671 = vpop.f32.mrb[0].mxu0
      %v672 = vadd.f32 0.0, %v671
      %v673 = vpop.f32.mrb[0].mxu0
      %v674 = vpop.f32.mrb[0].mxu0
      %v675 = vpop.f32.mrb[0].mxu0
      %676 = vdwg.mxu0
      %v677 = vrcp.pop %v627
      %v678 = vmul.f32 %v672, %v677
      %680 = vrot.lane.b32.xlu0 %v458, 8
      %v681 = vpop.permute.xlu0 %680
      %684 = vrot.lane.b32.xlu0 %v568, 16
      %v685 = vpop.permute.xlu0 %684
      %688 = vrot.lane.b32.xlu0 %v678, 24
      %v689 = vpop.permute.xlu0 %688
      %v691 = vsel %vm286, %v345, %v681
      %v692 = vsel %vm239, %v691, %v685
      %vm693 = vcmask 195584
      %v694 = vsel %vm693, %v692, %v689
      %vm695 = vcmask 261120
      %696 = vst.msk [vmem:[%s230] sm:$0xff] %vm695, %v694
      %p697 = scmp.lt.s32.totalorder %s18, 1
      %s698 = scalar_select %p697, %s18, 1
      %p699 = scmp.lt.s32.totalorder %s19, 0
      %s700 = scalar_select %p699, %s19, 0
      %s701 = sadd.s32 %s700, %s698
      %s702 = smul.addr %s701, 8
      %s703 = scalar_lea.vmem %s3, %s702
      // Predicated region
      $region33: #{attention_layer2_forward.8} parent=31 // pred_check
        %p704 = pneg %p126
      $region34: #{attention_layer2_forward.8} parent=31 // pred_check_branch
        %706 = sbr.rel (%p704) target = $region36
      $region35: #{attention_layer2_forward.8} parent=31 // pred_region
        _
      $region36: #{attention_layer2_forward.8} parent=31 // pred_fallthru
        _
    $region32: #{attention_layer2_forward.8} parent=5 // pred_fallthru
      _
    %p707 = scmp.le.s32.totalorder 2, %s9
    // Predicated region
    $region37: #{attention_layer2_forward.8} parent=5 // pred_check
      %p708 = pneg %p707
    $region38: #{attention_layer2_forward.8} parent=5 // pred_check_branch
      %710 = sbr.rel (%p708) target = $region40
    $region39: #{attention_layer2_forward.8} parent=5 // pred_region
      %s711 = ssub.s32 %s9, 2
      // Predicated region
      $region41: #{attention_layer2_forward.8} parent=39 // pred_check
        %p712 = pneg %p132
      $region42: #{attention_layer2_forward.8} parent=39 // pred_check_branch
        %714 = sbr.rel (%p712) target = $region44
      $region43: #{attention_layer2_forward.8} parent=39 // pred_region
        %p715 = scmp.lt.s32.totalorder %s20, 1
        %s716 = scalar_select %p715, %s20, 1
        %p717 = scmp.lt.s32.totalorder %s21, 0
        %s718 = scalar_select %p717, %s21, 0
        %s719 = sadd.s32 %s718, %s716
        %s720 = smul.addr %s719, 8
        %s721 = scalar_lea.vmem %s3, %s720
      $region44: #{attention_layer2_forward.8} parent=39 // pred_fallthru
        _
    $region40: #{attention_layer2_forward.8} parent=5 // pred_fallthru
      _
  $region6: #{attention_layer2_forward.8} parent=0 // loop_footer
    %s13 = sadd.s32 1, %s9
  $region7: #{attention_layer2_forward.8} parent=0 // loop_footer_branch
    %8 = sbr.rel target = $region3
  $region8: #{attention_layer2_forward.8} parent=0 // loop_exit
    _

</llo_original>
